<compile_context>
chip_gen: v5e
topology: v5e:2x2
jax: 0.10.0
libtpu: 0.0.40
codegen_flags: <defaults>
</compile_context>

<pallas_src>
import functools
import math

import jax
import jax.numpy as jnp
from jax import lax
from jax.experimental import pallas as pl
from jax.experimental.pallas import tpu as pltpu


# ---------------------------------------------------------------------------
# small helpers
# ---------------------------------------------------------------------------
def _round_up(x, m):
    return ((x + m - 1) // m) * m


def _vmem_limit_bytes():
    """Generation-aware scoped-VMEM budget."""
    try:
        kind = jax.devices()[0].device_kind.lower()
    except Exception:  # pragma: no cover
        kind = ""
    if "v2" in kind or "v3" in kind:
        return 14 * 1024 * 1024
    if "v4" in kind or "v5" in kind or "v6" in kind:
        return 96 * 1024 * 1024          # 128 MiB physical VMEM
    # v7x-class (64 MiB physical per TensorCore) / unknown: keep headroom.
    return 48 * 1024 * 1024


def _choose_row_tile(M, max_tile=1024):
    """Row tile for purely row-parallel kernels; returns (tm, M_padded)."""
    if M <= max_tile:
        t = _round_up(max(M, 8), 8)
        return t, t
    M_pad = _round_up(M, 256)
    for t in (2048, 1024, 512, 256):
        if t <= max_tile and M_pad % t == 0:
            return t, M_pad
    return 256, M_pad


def _plan_expand_tiles(M, K, N, out_dim, x_bytes, w_bytes, o_bytes, vmem_limit):
    """Pick (tm, tk, tn, M_pad) for the expand matmul under a byte budget."""
    budget = int(0.55 * vmem_limit)

    # --- N tile: multiple of out_dim (LN groups never straddle a tile),
    #     divides N, prefer lane-dense (%128) and large.
    tn = None
    best_any = None
    max_tn = min(N, 1024)
    for g in range(N // out_dim, 0, -1):
        t = g * out_dim
        if t > max_tn or N % t:
            continue
        if t % 128 == 0:
            tn = t
            break
        if best_any is None:
            best_any = t
    if tn is None:
        tn = best_any if best_any is not None else N

    def fits(tm, tk):
        need = 2 * tm * tk * x_bytes + 2 * tk * tn * w_bytes + 2 * tm * tn * o_bytes
        if o_bytes != 4:
            need += tm * tn * 4          # f32 accumulator scratch
        return need <= budget

    # --- K: keep untiled (weight panel resident across the M loop) when the
    #     double-buffered panels fit the byte budget; otherwise tile it.
    tk = K
    if not fits(256, K):
        for cand in (2048, 1024, 512, 256, 128):
            if K % cand == 0 and fits(256, cand):
                tk = cand
                break
        else:
            tk = K                       # rare: rely on vmem_limit_bytes

    # --- M tile.
    if M <= 1024:
        tm = _round_up(max(M, 8), 8)
        while not fits(tm, tk) and tm > 8:
            tm = _round_up(tm // 2, 8)
        M_pad = _round_up(M, tm)
    else:
        tm = 256
        for cand in (1024, 512):
            if fits(cand, tk):
                tm = cand
                break
        M_pad = _round_up(M, tm)

    # --- ensure at least 2 parallel blocks so both v7x TensorCores get work.
    if (M_pad // tm) * (N // tn) < 2 and tm >= 16 and (tm // 2) % 8 == 0:
        tm //= 2                         # tm//2 still divides M_pad

    return tm, tk, tn, M_pad


# ---------------------------------------------------------------------------
# kernel 1: expand matmul (bf16 MXU, f32 acc), optional fused LayerNorm
# ---------------------------------------------------------------------------
def _expand_kernel(x_ref, w_ref, g_ref, b_ref, o_ref, *scratch,
                   fuse_ln, out_dim, eps, compute_dtype):
    # grid = (j: N tiles [outer], i: M tiles, k: K tiles [inner, reduction])
    acc_ref = scratch[0] if scratch else o_ref   # f32 output -> accumulate in place

    @pl.when(pl.program_id(2) == 0)
    def _():
        acc_ref[...] = jnp.zeros_like(acc_ref)

    acc_ref[...] += jnp.dot(
        x_ref[...].astype(compute_dtype),
        w_ref[...].astype(compute_dtype),
        preferred_element_type=jnp.float32,
    ).astype(acc_ref.dtype)

    @pl.when(pl.program_id(2) == pl.num_programs(2) - 1)
    def _():
        a = acc_ref[...].astype(jnp.float32)
        if fuse_ln:
            tn = a.shape[-1]
            gamma = g_ref[...].astype(jnp.float32)   # (1, out_dim)
            beta = b_ref[...].astype(jnp.float32)    # (1, out_dim)
            # Each contiguous out_dim chunk is one shuffled token's features.
            for g in range(tn // out_dim):
                lo, hi = g * out_dim, (g + 1) * out_dim
                xg = a[:, lo:hi]
                mean = jnp.mean(xg, axis=-1, keepdims=True)
                xc = xg - mean
                var = jnp.mean(xc * xc, axis=-1, keepdims=True)
                yg = xc * lax.rsqrt(var + eps) * gamma + beta
                o_ref[:, lo:hi] = yg.astype(o_ref.dtype)
        else:
            o_ref[...] = a.astype(o_ref.dtype)


def _expand(x2d, w, gamma, beta, *, out_dim, eps, fuse_ln, compute_dtype,
            out_dtype=jnp.float32):
    """x2d: (M, K) @ w: (K, N) [N a multiple of out_dim], optional fused LN."""
    M, K = x2d.shape
    Kw, N = w.shape
    assert K == Kw and N % out_dim == 0

    vmem_limit = _vmem_limit_bytes()
    xb = jnp.dtype(x2d.dtype).itemsize
    wb = jnp.dtype(w.dtype).itemsize
    ob = jnp.dtype(out_dtype).itemsize
    tm, tk, tn, M_pad = _plan_expand_tiles(M, K, N, out_dim, xb, wb, ob, vmem_limit)

    if M_pad != M:
        x2d = jnp.pad(x2d, ((0, M_pad - M), (0, 0)))

    grid = (N // tn, M_pad // tm, K // tk)   # N outer -> weight panel reused over M
    use_scratch = (out_dtype != jnp.float32)
    scratch_shapes = [pltpu.VMEM((tm, tn), jnp.float32)] if use_scratch else []

    kernel = functools.partial(
        _expand_kernel, fuse_ln=fuse_ln, out_dim=out_dim, eps=eps,
        compute_dtype=compute_dtype)

    out = pl.pallas_call(
        kernel,
        out_shape=jax.ShapeDtypeStruct((M_pad, N), out_dtype),
        grid_spec=pltpu.PrefetchScalarGridSpec(
            num_scalar_prefetch=0,
            grid=grid,
            in_specs=[
                pl.BlockSpec((tm, tk), lambda j, i, k: (i, k)),
                pl.BlockSpec((tk, tn), lambda j, i, k: (k, j)),
                pl.BlockSpec((1, out_dim), lambda j, i, k: (0, 0)),  # resident
                pl.BlockSpec((1, out_dim), lambda j, i, k: (0, 0)),  # resident
            ],
            out_specs=pl.BlockSpec((tm, tn), lambda j, i, k: (i, j)),
            scratch_shapes=scratch_shapes,
        ),
        compiler_params=pltpu.CompilerParams(
            dimension_semantics=("parallel", "parallel", "arbitrary"),
            vmem_limit_bytes=vmem_limit,
        ),
    )(x2d, w, gamma.reshape(1, -1), beta.reshape(1, -1))
    return out[:M]


# ---------------------------------------------------------------------------
# kernel 2: standalone LayerNorm (only used on the spatial-padding fallback)
# ---------------------------------------------------------------------------
def _ln_kernel(x_ref, g_ref, b_ref, o_ref, *, eps):
    x = x_ref[...].astype(jnp.float32)
    mean = jnp.mean(x, axis=-1, keepdims=True)
    xc = x - mean
    var = jnp.mean(xc * xc, axis=-1, keepdims=True)
    o_ref[...] = (xc * lax.rsqrt(var + eps) * g_ref[...] + b_ref[...]).astype(o_ref.dtype)


def _layer_norm(x2d, gamma, beta, eps):
    """x2d: (M, D), gamma/beta: (1, D)."""
    M, D = x2d.shape
    tm, M_pad = _choose_row_tile(M, max_tile=2048)
    if M_pad != M:
        x2d = jnp.pad(x2d, ((0, M_pad - M), (0, 0)))
    # TODO(synk): when D < 128 the output stores are masked (vst.msk); fine for
    # this rarely-hit fallback path.
    out = pl.pallas_call(
        functools.partial(_ln_kernel, eps=eps),
        out_shape=jax.ShapeDtypeStruct((M_pad, D), x2d.dtype),
        grid_spec=pltpu.PrefetchScalarGridSpec(
            num_scalar_prefetch=0,
            grid=(M_pad // tm,),
            in_specs=[
                pl.BlockSpec((tm, D), lambda i: (i, 0)),
                pl.BlockSpec((1, D), lambda i: (0, 0)),
                pl.BlockSpec((1, D), lambda i: (0, 0)),
            ],
            out_specs=pl.BlockSpec((tm, D), lambda i: (i, 0)),
        ),
        compiler_params=pltpu.CompilerParams(
            dimension_semantics=("parallel",),
            vmem_limit_bytes=_vmem_limit_bytes(),
        ),
    )(x2d, gamma, beta)
    return out[:M]


# ---------------------------------------------------------------------------
# module
# ---------------------------------------------------------------------------
class PatchShufflePallas:
    """JAX/Pallas port of the PyTorch PatchShuffle module (bf16 MXU path)."""

    def __init__(self, dim, out_dim, dim_scale=2, eps=1e-5, key=None,
                 compute_dtype=jnp.bfloat16):
        self.dim = dim
        self.out_dim = out_dim
        self.dim_scale = dim_scale
        self.eps = eps
        self.compute_dtype = compute_dtype

        if key is None:
            key = jax.random.PRNGKey(0)

        C = out_dim * dim_scale ** 2
        self.C = C
        bound = 1.0 / math.sqrt(dim)
        # nn.Linear(dim, C, bias=False); stored as (in, out) so forward is x @ W.
        w = jax.random.uniform(key, (dim, C), jnp.float32, -bound, bound)

        # Lane-dense padding of the N dimension by *whole* LN groups, so the
        # matmul output tiles are multiples of 128 lanes (unmasked stores).
        n_pad = C
        if C % 128 != 0:
            step = math.lcm(out_dim, 128)
            cand = _round_up(C, step)
            if cand <= 2 * C:
                n_pad = cand
        if n_pad != C:
            w = jnp.pad(w, ((0, 0), (0, n_pad - C)))
        self.N_pad = n_pad
        # bf16 weight -> native MXU path; f32 accumulation kept in-kernel.
        self.w = w.astype(compute_dtype)

        # nn.LayerNorm(out_dim) default-initialized affine parameters.
        self.gamma = jnp.ones((out_dim,), jnp.float32)
        self.beta = jnp.zeros((out_dim,), jnp.float32)

    def __call__(self, x, input_size, out_size):
        H, W = input_size
        Hout, Wout = out_size
        B, L, D = x.shape
        assert L == H * W, "input feature has wrong size"
        assert D == self.dim

        ds = self.dim_scale
        od = self.out_dim
        C = self.C
        M = B * L
        no_spatial_pad = (H % ds == 0) and (W % ds == 0)

        # ---- 1) expand Linear (+ fused per-token LayerNorm when possible) ---
        y = _expand(
            x.reshape(M, D), self.w, self.gamma, self.beta,
            out_dim=od, eps=self.eps, fuse_ln=no_spatial_pad,
            compute_dtype=self.compute_dtype, out_dtype=jnp.float32,
        )                                              # (M, N_pad)
        if self.N_pad != C:
            y = y[:, :C]

        # ---- 2) pixel-shuffle rearrange (JAX glue, data movement only) ------
        y = y.reshape(B, H, W, C)
        if not no_spatial_pad:                          # mirror PyTorch F.pad
            H_pad = ds - H % ds
            W_pad = ds - W % ds
            y = jnp.pad(y, ((0, 0), (0, H_pad), (0, W_pad), (0, 0)))
        Hp, Wp = y.shape[1], y.shape[2]
        # 'b h w (p1 p2 c) -> b (h p1) (w p2) c'
        y = (
            y.reshape(B, Hp, Wp, ds, ds, od)
            .transpose(0, 1, 3, 2, 4, 5)
            .reshape(B, Hp * ds, Wp * ds, od)
        )
        y = y[:, :Hout, :Wout, :].reshape(B * Hout * Wout, od)

        # ---- 3) LayerNorm (already fused above unless spatial padding) ------
        if not no_spatial_pad:
            y = _layer_norm(y, self.gamma[None, :], self.beta[None, :], self.eps)

        return y.reshape(B, Hout * Wout, od)


# ---------------------------------------------------------------------------
# pure-JAX reference of the PyTorch forward (same bf16 matmul path)
# ---------------------------------------------------------------------------
def _reference(x, mod, input_size, out_size):
    H, W = input_size
    Hout, Wout = out_size
    B, L, D = x.shape
    ds = mod.dim_scale
    od = mod.out_dim
    C = od * ds * ds
    y = jnp.dot(
        x.reshape(B * L, D).astype(mod.compute_dtype),
        mod.w[:, :C].astype(mod.compute_dtype),
        preferred_element_type=jnp.float32,
    )
    y = y.reshape(B, H, W, C)
    if H % ds != 0 or W % ds != 0:
        H_pad = ds - H % ds
        W_pad = ds - W % ds
        y = jnp.pad(y, ((0, 0), (0, H_pad), (0, W_pad), (0, 0)))
    Hp, Wp = y.shape[1], y.shape[2]
    y = (
        y.reshape(B, Hp, Wp, ds, ds, od)
        .transpose(0, 1, 3, 2, 4, 5)
        .reshape(B, Hp * ds, Wp * ds, od)
    )
    y = y[:, :Hout, :Wout, :].reshape(B, Hout * Wout, od)
    mean = y.mean(-1, keepdims=True)
    var = ((y - mean) ** 2).mean(-1, keepdims=True)
    return (y - mean) * lax.rsqrt(var + mod.eps) * mod.gamma + mod.beta


if __name__ == "__main__":
    # Small shapes consistent with the module.
    B = 2
    H = W = 8
    L = H * W                       # 64
    dim = 32
    out_dim = 16
    dim_scale = 2
    Hout, Wout = H * dim_scale, W * dim_scale   # 16, 16

    key = jax.random.PRNGKey(0)
    kx, kp, kx2 = jax.random.split(key, 3)
    x = jax.random.normal(kx, (B, L, dim), jnp.float32)

    mod = PatchShufflePallas(dim, out_dim, dim_scale=dim_scale, key=kp)

    # ---- main (fused matmul+LN) path -----------------------------------
    out = mod(x, (H, W), (Hout, Wout))
    jax.block_until_ready(out)
    ref = _reference(x, mod, (H, W), (Hout, Wout))
    assert out.shape == (B, Hout * Wout, out_dim), out.shape
    assert jnp.allclose(out, ref, atol=1e-4, rtol=1e-4), float(
        jnp.max(jnp.abs(out - ref)))

    # ---- spatial-padding fallback path (H, W not divisible by dim_scale) ----
    H2 = W2 = 7
    L2 = H2 * W2
    H2out, W2out = H2 * dim_scale, W2 * dim_scale       # 14, 14
    x2 = jax.random.normal(kx2, (B, L2, dim), jnp.float32)
    out2 = mod(x2, (H2, W2), (H2out, W2out))
    jax.block_until_ready(out2)
    ref2 = _reference(x2, mod, (H2, W2), (H2out, W2out))
    assert out2.shape == (B, H2out * W2out, out_dim), out2.shape
    assert jnp.allclose(out2, ref2, atol=1e-4, rtol=1e-4), float(
        jnp.max(jnp.abs(out2 - ref2)))

    print("KERNEL_OK")
</pallas_src>

<mosaic_0001>
module attributes {stable_mosaic.version = 11 : i64} {
  func.func @_expand_kernel(%arg0: i32, %arg1: i32, %arg2: i32, %arg3: memref<64x32xf32, #tpu.memory_space<vmem>>, %arg4: memref<32x128xbf16, #tpu.memory_space<vmem>>, %arg5: memref<1x16xf32, #tpu.memory_space<vmem>>, %arg6: memref<1x16xf32, #tpu.memory_space<vmem>>, %arg7: memref<64x128xf32, #tpu.memory_space<vmem>>) attributes {dimension_semantics = [#tpu.dimension_semantics<parallel>, #tpu.dimension_semantics<parallel>, #tpu.dimension_semantics<arbitrary>], iteration_bounds = array<i64: 1, 2, 1>, scalar_prefetch = 0 : i64, scratch_operands = 0 : i64, tpu.core_type = #tpu.core_type<tc>, window_params = [{transform_indices = @transform_0, window_bounds = array<i64: 64, 32>}, {transform_indices = @transform_1, window_bounds = array<i64: 32, 128>}, {pipeline_mode = #tpu.pipeline_mode<synchronous>, transform_indices = @transform_2, window_bounds = array<i64: 1, 16>}, {pipeline_mode = #tpu.pipeline_mode<synchronous>, transform_indices = @transform_3, window_bounds = array<i64: 1, 16>}, {transform_indices = @transform_4, window_bounds = array<i64: 64, 128>}]} {
    %c0_i32 = arith.constant 0 : i32
    %0 = arith.cmpi eq, %arg2, %c0_i32 : i32
    %1 = arith.extui %0 : i1 to i32
    %c0_i32_0 = arith.constant 0 : i32
    %2 = arith.cmpi ne, %1, %c0_i32_0 : i32
    scf.if %2 {
      %cst_10 = arith.constant 0.000000e+00 : f32
      %13 = vector.broadcast %cst_10 : f32 to vector<64x128xf32>
      %c0_11 = arith.constant 0 : index
      %c0_12 = arith.constant 0 : index
      %14 = vector.load %arg7[%c0_11, %c0_12] : memref<64x128xf32, #tpu.memory_space<vmem>>, vector<64x128xf32>
      tpu.vector_store %arg7[%c0_11, %c0_12], %13 {strides = array<i32>} : memref<64x128xf32, #tpu.memory_space<vmem>>, vector<64x128xf32>,
    } else {
    }
    %c0 = arith.constant 0 : index
    %c0_1 = arith.constant 0 : index
    %3 = vector.load %arg7[%c0, %c0_1] : memref<64x128xf32, #tpu.memory_space<vmem>>, vector<64x128xf32>
    %c0_2 = arith.constant 0 : index
    %c0_3 = arith.constant 0 : index
    %4 = vector.load %arg3[%c0_2, %c0_3] : memref<64x32xf32, #tpu.memory_space<vmem>>, vector<64x32xf32>
    %5 = arith.truncf %4 : vector<64x32xf32> to vector<64x32xbf16>
    %c0_4 = arith.constant 0 : index
    %c0_5 = arith.constant 0 : index
    %6 = vector.load %arg4[%c0_4, %c0_5] : memref<32x128xbf16, #tpu.memory_space<vmem>>, vector<32x128xbf16>
    %cst = arith.constant dense<0.000000e+00> : vector<64x128xf32>
    %7 = tpu.matmul %5, %6, %cst {dimension_numbers = #tpu.dot_dimension_numbers<[1], [0], [0], [1], [0, 0, 1, 1], [], []>} : vector<64x32xbf16>, vector<32x128xbf16>, vector<64x128xf32> -> vector<64x128xf32>
    %8 = arith.addf %3, %7 : vector<64x128xf32>
    %c0_6 = arith.constant 0 : index
    %c0_7 = arith.constant 0 : index
    %9 = vector.load %arg7[%c0_6, %c0_7] : memref<64x128xf32, #tpu.memory_space<vmem>>, vector<64x128xf32>
    tpu.vector_store %arg7[%c0_6, %c0_7], %8 {strides = array<i32>} : memref<64x128xf32, #tpu.memory_space<vmem>>, vector<64x128xf32>,
    %c0_i32_8 = arith.constant 0 : i32
    %10 = arith.cmpi eq, %arg2, %c0_i32_8 : i32
    %11 = arith.extui %10 : i1 to i32
    %c0_i32_9 = arith.constant 0 : i32
    %12 = arith.cmpi ne, %11, %c0_i32_9 : i32
    scf.if %12 {
      %c0_10 = arith.constant 0 : index
      %c0_11 = arith.constant 0 : index
      %13 = vector.load %arg7[%c0_10, %c0_11] : memref<64x128xf32, #tpu.memory_space<vmem>>, vector<64x128xf32>
      %c0_12 = arith.constant 0 : index
      %c0_13 = arith.constant 0 : index
      %14 = vector.load %arg5[%c0_12, %c0_13] : memref<1x16xf32, #tpu.memory_space<vmem>>, vector<1x16xf32>
      %c0_14 = arith.constant 0 : index
      %c0_15 = arith.constant 0 : index
      %15 = vector.load %arg6[%c0_14, %c0_15] : memref<1x16xf32, #tpu.memory_space<vmem>>, vector<1x16xf32>
      %16 = vector.extract_strided_slice %13 {offsets = [0, 0], sizes = [64, 16], strides = [1, 1]} : vector<64x128xf32> to vector<64x16xf32>
      %cst_16 = arith.constant dense<0.000000e+00> : vector<64xf32>
      %17 = vector.multi_reduction <add>, %16, %cst_16 [1] : vector<64x16xf32> to vector<64xf32>
      %18 = vector.shape_cast %17 : vector<64xf32> to vector<64x1xf32>
      %cst_17 = arith.constant 1.600000e+01 : f32
      %19 = vector.broadcast %cst_17 : f32 to vector<64x1xf32>
      %20 = arith.divf %18, %19 : vector<64x1xf32>
      %21 = vector.broadcast %20 : vector<64x1xf32> to vector<64x16xf32>
      %22 = arith.subf %16, %21 : vector<64x16xf32>
      %23 = arith.mulf %22, %22 : vector<64x16xf32>
      %cst_18 = arith.constant dense<0.000000e+00> : vector<64xf32>
      %24 = vector.multi_reduction <add>, %23, %cst_18 [1] : vector<64x16xf32> to vector<64xf32>
      %25 = vector.shape_cast %24 : vector<64xf32> to vector<64x1xf32>
      %cst_19 = arith.constant 1.600000e+01 : f32
      %26 = vector.broadcast %cst_19 : f32 to vector<64x1xf32>
      %27 = arith.divf %25, %26 : vector<64x1xf32>
      %cst_20 = arith.constant 9.99999974E-6 : f32
      %28 = vector.broadcast %cst_20 : f32 to vector<64x1xf32>
      %29 = arith.addf %27, %28 : vector<64x1xf32>
      %30 = math.rsqrt %29 : vector<64x1xf32>
      %31 = vector.broadcast %30 : vector<64x1xf32> to vector<64x16xf32>
      %32 = arith.mulf %22, %31 : vector<64x16xf32>
      %33 = vector.broadcast %14 : vector<1x16xf32> to vector<64x16xf32>
      %34 = arith.mulf %32, %33 : vector<64x16xf32>
      %35 = vector.broadcast %15 : vector<1x16xf32> to vector<64x16xf32>
      %36 = arith.addf %34, %35 : vector<64x16xf32>
      %c0_21 = arith.constant 0 : index
      %c0_22 = arith.constant 0 : index
      %37 = vector.load %arg7[%c0_21, %c0_22] : memref<64x128xf32, #tpu.memory_space<vmem>>, vector<64x16xf32>
      tpu.vector_store %arg7[%c0_21, %c0_22], %36 {strides = array<i32>} : memref<64x128xf32, #tpu.memory_space<vmem>>, vector<64x16xf32>,
      %38 = vector.extract_strided_slice %13 {offsets = [0, 16], sizes = [64, 16], strides = [1, 1]} : vector<64x128xf32> to vector<64x16xf32>
      %cst_23 = arith.constant dense<0.000000e+00> : vector<64xf32>
      %39 = vector.multi_reduction <add>, %38, %cst_23 [1] : vector<64x16xf32> to vector<64xf32>
      %40 = vector.shape_cast %39 : vector<64xf32> to vector<64x1xf32>
      %cst_24 = arith.constant 1.600000e+01 : f32
      %41 = vector.broadcast %cst_24 : f32 to vector<64x1xf32>
      %42 = arith.divf %40, %41 : vector<64x1xf32>
      %43 = vector.broadcast %42 : vector<64x1xf32> to vector<64x16xf32>
      %44 = arith.subf %38, %43 : vector<64x16xf32>
      %45 = arith.mulf %44, %44 : vector<64x16xf32>
      %cst_25 = arith.constant dense<0.000000e+00> : vector<64xf32>
      %46 = vector.multi_reduction <add>, %45, %cst_25 [1] : vector<64x16xf32> to vector<64xf32>
      %47 = vector.shape_cast %46 : vector<64xf32> to vector<64x1xf32>
      %cst_26 = arith.constant 1.600000e+01 : f32
      %48 = vector.broadcast %cst_26 : f32 to vector<64x1xf32>
      %49 = arith.divf %47, %48 : vector<64x1xf32>
      %cst_27 = arith.constant 9.99999974E-6 : f32
      %50 = vector.broadcast %cst_27 : f32 to vector<64x1xf32>
      %51 = arith.addf %49, %50 : vector<64x1xf32>
      %52 = math.rsqrt %51 : vector<64x1xf32>
      %53 = vector.broadcast %52 : vector<64x1xf32> to vector<64x16xf32>
      %54 = arith.mulf %44, %53 : vector<64x16xf32>
      %55 = vector.broadcast %14 : vector<1x16xf32> to vector<64x16xf32>
      %56 = arith.mulf %54, %55 : vector<64x16xf32>
      %57 = vector.broadcast %15 : vector<1x16xf32> to vector<64x16xf32>
      %58 = arith.addf %56, %57 : vector<64x16xf32>
      %c0_28 = arith.constant 0 : index
      %c16 = arith.constant 16 : index
      %59 = vector.load %arg7[%c0_28, %c16] : memref<64x128xf32, #tpu.memory_space<vmem>>, vector<64x16xf32>
      tpu.vector_store %arg7[%c0_28, %c16], %58 {strides = array<i32>} : memref<64x128xf32, #tpu.memory_space<vmem>>, vector<64x16xf32>,
      %60 = vector.extract_strided_slice %13 {offsets = [0, 32], sizes = [64, 16], strides = [1, 1]} : vector<64x128xf32> to vector<64x16xf32>
      %cst_29 = arith.constant dense<0.000000e+00> : vector<64xf32>
      %61 = vector.multi_reduction <add>, %60, %cst_29 [1] : vector<64x16xf32> to vector<64xf32>
      %62 = vector.shape_cast %61 : vector<64xf32> to vector<64x1xf32>
      %cst_30 = arith.constant 1.600000e+01 : f32
      %63 = vector.broadcast %cst_30 : f32 to vector<64x1xf32>
      %64 = arith.divf %62, %63 : vector<64x1xf32>
      %65 = vector.broadcast %64 : vector<64x1xf32> to vector<64x16xf32>
      %66 = arith.subf %60, %65 : vector<64x16xf32>
      %67 = arith.mulf %66, %66 : vector<64x16xf32>
      %cst_31 = arith.constant dense<0.000000e+00> : vector<64xf32>
      %68 = vector.multi_reduction <add>, %67, %cst_31 [1] : vector<64x16xf32> to vector<64xf32>
      %69 = vector.shape_cast %68 : vector<64xf32> to vector<64x1xf32>
      %cst_32 = arith.constant 1.600000e+01 : f32
      %70 = vector.broadcast %cst_32 : f32 to vector<64x1xf32>
      %71 = arith.divf %69, %70 : vector<64x1xf32>
      %cst_33 = arith.constant 9.99999974E-6 : f32
      %72 = vector.broadcast %cst_33 : f32 to vector<64x1xf32>
      %73 = arith.addf %71, %72 : vector<64x1xf32>
      %74 = math.rsqrt %73 : vector<64x1xf32>
      %75 = vector.broadcast %74 : vector<64x1xf32> to vector<64x16xf32>
      %76 = arith.mulf %66, %75 : vector<64x16xf32>
      %77 = vector.broadcast %14 : vector<1x16xf32> to vector<64x16xf32>
      %78 = arith.mulf %76, %77 : vector<64x16xf32>
      %79 = vector.broadcast %15 : vector<1x16xf32> to vector<64x16xf32>
      %80 = arith.addf %78, %79 : vector<64x16xf32>
      %c0_34 = arith.constant 0 : index
      %c32 = arith.constant 32 : index
      %81 = vector.load %arg7[%c0_34, %c32] : memref<64x128xf32, #tpu.memory_space<vmem>>, vector<64x16xf32>
      tpu.vector_store %arg7[%c0_34, %c32], %80 {strides = array<i32>} : memref<64x128xf32, #tpu.memory_space<vmem>>, vector<64x16xf32>,
      %82 = vector.extract_strided_slice %13 {offsets = [0, 48], sizes = [64, 16], strides = [1, 1]} : vector<64x128xf32> to vector<64x16xf32>
      %cst_35 = arith.constant dense<0.000000e+00> : vector<64xf32>
      %83 = vector.multi_reduction <add>, %82, %cst_35 [1] : vector<64x16xf32> to vector<64xf32>
      %84 = vector.shape_cast %83 : vector<64xf32> to vector<64x1xf32>
      %cst_36 = arith.constant 1.600000e+01 : f32
      %85 = vector.broadcast %cst_36 : f32 to vector<64x1xf32>
      %86 = arith.divf %84, %85 : vector<64x1xf32>
      %87 = vector.broadcast %86 : vector<64x1xf32> to vector<64x16xf32>
      %88 = arith.subf %82, %87 : vector<64x16xf32>
      %89 = arith.mulf %88, %88 : vector<64x16xf32>
      %cst_37 = arith.constant dense<0.000000e+00> : vector<64xf32>
      %90 = vector.multi_reduction <add>, %89, %cst_37 [1] : vector<64x16xf32> to vector<64xf32>
      %91 = vector.shape_cast %90 : vector<64xf32> to vector<64x1xf32>
      %cst_38 = arith.constant 1.600000e+01 : f32
      %92 = vector.broadcast %cst_38 : f32 to vector<64x1xf32>
      %93 = arith.divf %91, %92 : vector<64x1xf32>
      %cst_39 = arith.constant 9.99999974E-6 : f32
      %94 = vector.broadcast %cst_39 : f32 to vector<64x1xf32>
      %95 = arith.addf %93, %94 : vector<64x1xf32>
      %96 = math.rsqrt %95 : vector<64x1xf32>
      %97 = vector.broadcast %96 : vector<64x1xf32> to vector<64x16xf32>
      %98 = arith.mulf %88, %97 : vector<64x16xf32>
      %99 = vector.broadcast %14 : vector<1x16xf32> to vector<64x16xf32>
      %100 = arith.mulf %98, %99 : vector<64x16xf32>
      %101 = vector.broadcast %15 : vector<1x16xf32> to vector<64x16xf32>
      %102 = arith.addf %100, %101 : vector<64x16xf32>
      %c0_40 = arith.constant 0 : index
      %c48 = arith.constant 48 : index
      %103 = vector.load %arg7[%c0_40, %c48] : memref<64x128xf32, #tpu.memory_space<vmem>>, vector<64x16xf32>
      tpu.vector_store %arg7[%c0_40, %c48], %102 {strides = array<i32>} : memref<64x128xf32, #tpu.memory_space<vmem>>, vector<64x16xf32>,
      %104 = vector.extract_strided_slice %13 {offsets = [0, 64], sizes = [64, 16], strides = [1, 1]} : vector<64x128xf32> to vector<64x16xf32>
      %cst_41 = arith.constant dense<0.000000e+00> : vector<64xf32>
      %105 = vector.multi_reduction <add>, %104, %cst_41 [1] : vector<64x16xf32> to vector<64xf32>
      %106 = vector.shape_cast %105 : vector<64xf32> to vector<64x1xf32>
      %cst_42 = arith.constant 1.600000e+01 : f32
      %107 = vector.broadcast %cst_42 : f32 to vector<64x1xf32>
      %108 = arith.divf %106, %107 : vector<64x1xf32>
      %109 = vector.broadcast %108 : vector<64x1xf32> to vector<64x16xf32>
      %110 = arith.subf %104, %109 : vector<64x16xf32>
      %111 = arith.mulf %110, %110 : vector<64x16xf32>
      %cst_43 = arith.constant dense<0.000000e+00> : vector<64xf32>
      %112 = vector.multi_reduction <add>, %111, %cst_43 [1] : vector<64x16xf32> to vector<64xf32>
      %113 = vector.shape_cast %112 : vector<64xf32> to vector<64x1xf32>
      %cst_44 = arith.constant 1.600000e+01 : f32
      %114 = vector.broadcast %cst_44 : f32 to vector<64x1xf32>
      %115 = arith.divf %113, %114 : vector<64x1xf32>
      %cst_45 = arith.constant 9.99999974E-6 : f32
      %116 = vector.broadcast %cst_45 : f32 to vector<64x1xf32>
      %117 = arith.addf %115, %116 : vector<64x1xf32>
      %118 = math.rsqrt %117 : vector<64x1xf32>
      %119 = vector.broadcast %118 : vector<64x1xf32> to vector<64x16xf32>
      %120 = arith.mulf %110, %119 : vector<64x16xf32>
      %121 = vector.broadcast %14 : vector<1x16xf32> to vector<64x16xf32>
      %122 = arith.mulf %120, %121 : vector<64x16xf32>
      %123 = vector.broadcast %15 : vector<1x16xf32> to vector<64x16xf32>
      %124 = arith.addf %122, %123 : vector<64x16xf32>
      %c0_46 = arith.constant 0 : index
      %c64 = arith.constant 64 : index
      %125 = vector.load %arg7[%c0_46, %c64] : memref<64x128xf32, #tpu.memory_space<vmem>>, vector<64x16xf32>
      tpu.vector_store %arg7[%c0_46, %c64], %124 {strides = array<i32>} : memref<64x128xf32, #tpu.memory_space<vmem>>, vector<64x16xf32>,
      %126 = vector.extract_strided_slice %13 {offsets = [0, 80], sizes = [64, 16], strides = [1, 1]} : vector<64x128xf32> to vector<64x16xf32>
      %cst_47 = arith.constant dense<0.000000e+00> : vector<64xf32>
      %127 = vector.multi_reduction <add>, %126, %cst_47 [1] : vector<64x16xf32> to vector<64xf32>
      %128 = vector.shape_cast %127 : vector<64xf32> to vector<64x1xf32>
      %cst_48 = arith.constant 1.600000e+01 : f32
      %129 = vector.broadcast %cst_48 : f32 to vector<64x1xf32>
      %130 = arith.divf %128, %129 : vector<64x1xf32>
      %131 = vector.broadcast %130 : vector<64x1xf32> to vector<64x16xf32>
      %132 = arith.subf %126, %131 : vector<64x16xf32>
      %133 = arith.mulf %132, %132 : vector<64x16xf32>
      %cst_49 = arith.constant dense<0.000000e+00> : vector<64xf32>
      %134 = vector.multi_reduction <add>, %133, %cst_49 [1] : vector<64x16xf32> to vector<64xf32>
      %135 = vector.shape_cast %134 : vector<64xf32> to vector<64x1xf32>
      %cst_50 = arith.constant 1.600000e+01 : f32
      %136 = vector.broadcast %cst_50 : f32 to vector<64x1xf32>
      %137 = arith.divf %135, %136 : vector<64x1xf32>
      %cst_51 = arith.constant 9.99999974E-6 : f32
      %138 = vector.broadcast %cst_51 : f32 to vector<64x1xf32>
      %139 = arith.addf %137, %138 : vector<64x1xf32>
      %140 = math.rsqrt %139 : vector<64x1xf32>
      %141 = vector.broadcast %140 : vector<64x1xf32> to vector<64x16xf32>
      %142 = arith.mulf %132, %141 : vector<64x16xf32>
      %143 = vector.broadcast %14 : vector<1x16xf32> to vector<64x16xf32>
      %144 = arith.mulf %142, %143 : vector<64x16xf32>
      %145 = vector.broadcast %15 : vector<1x16xf32> to vector<64x16xf32>
      %146 = arith.addf %144, %145 : vector<64x16xf32>
      %c0_52 = arith.constant 0 : index
      %c80 = arith.constant 80 : index
      %147 = vector.load %arg7[%c0_52, %c80] : memref<64x128xf32, #tpu.memory_space<vmem>>, vector<64x16xf32>
      tpu.vector_store %arg7[%c0_52, %c80], %146 {strides = array<i32>} : memref<64x128xf32, #tpu.memory_space<vmem>>, vector<64x16xf32>,
      %148 = vector.extract_strided_slice %13 {offsets = [0, 96], sizes = [64, 16], strides = [1, 1]} : vector<64x128xf32> to vector<64x16xf32>
      %cst_53 = arith.constant dense<0.000000e+00> : vector<64xf32>
      %149 = vector.multi_reduction <add>, %148, %cst_53 [1] : vector<64x16xf32> to vector<64xf32>
      %150 = vector.shape_cast %149 : vector<64xf32> to vector<64x1xf32>
      %cst_54 = arith.constant 1.600000e+01 : f32
      %151 = vector.broadcast %cst_54 : f32 to vector<64x1xf32>
      %152 = arith.divf %150, %151 : vector<64x1xf32>
      %153 = vector.broadcast %152 : vector<64x1xf32> to vector<64x16xf32>
      %154 = arith.subf %148, %153 : vector<64x16xf32>
      %155 = arith.mulf %154, %154 : vector<64x16xf32>
      %cst_55 = arith.constant dense<0.000000e+00> : vector<64xf32>
      %156 = vector.multi_reduction <add>, %155, %cst_55 [1] : vector<64x16xf32> to vector<64xf32>
      %157 = vector.shape_cast %156 : vector<64xf32> to vector<64x1xf32>
      %cst_56 = arith.constant 1.600000e+01 : f32
      %158 = vector.broadcast %cst_56 : f32 to vector<64x1xf32>
      %159 = arith.divf %157, %158 : vector<64x1xf32>
      %cst_57 = arith.constant 9.99999974E-6 : f32
      %160 = vector.broadcast %cst_57 : f32 to vector<64x1xf32>
      %161 = arith.addf %159, %160 : vector<64x1xf32>
      %162 = math.rsqrt %161 : vector<64x1xf32>
      %163 = vector.broadcast %162 : vector<64x1xf32> to vector<64x16xf32>
      %164 = arith.mulf %154, %163 : vector<64x16xf32>
      %165 = vector.broadcast %14 : vector<1x16xf32> to vector<64x16xf32>
      %166 = arith.mulf %164, %165 : vector<64x16xf32>
      %167 = vector.broadcast %15 : vector<1x16xf32> to vector<64x16xf32>
      %168 = arith.addf %166, %167 : vector<64x16xf32>
      %c0_58 = arith.constant 0 : index
      %c96 = arith.constant 96 : index
      %169 = vector.load %arg7[%c0_58, %c96] : memref<64x128xf32, #tpu.memory_space<vmem>>, vector<64x16xf32>
      tpu.vector_store %arg7[%c0_58, %c96], %168 {strides = array<i32>} : memref<64x128xf32, #tpu.memory_space<vmem>>, vector<64x16xf32>,
      %170 = vector.extract_strided_slice %13 {offsets = [0, 112], sizes = [64, 16], strides = [1, 1]} : vector<64x128xf32> to vector<64x16xf32>
      %cst_59 = arith.constant dense<0.000000e+00> : vector<64xf32>
      %171 = vector.multi_reduction <add>, %170, %cst_59 [1] : vector<64x16xf32> to vector<64xf32>
      %172 = vector.shape_cast %171 : vector<64xf32> to vector<64x1xf32>
      %cst_60 = arith.constant 1.600000e+01 : f32
      %173 = vector.broadcast %cst_60 : f32 to vector<64x1xf32>
      %174 = arith.divf %172, %173 : vector<64x1xf32>
      %175 = vector.broadcast %174 : vector<64x1xf32> to vector<64x16xf32>
      %176 = arith.subf %170, %175 : vector<64x16xf32>
      %177 = arith.mulf %176, %176 : vector<64x16xf32>
      %cst_61 = arith.constant dense<0.000000e+00> : vector<64xf32>
      %178 = vector.multi_reduction <add>, %177, %cst_61 [1] : vector<64x16xf32> to vector<64xf32>
      %179 = vector.shape_cast %178 : vector<64xf32> to vector<64x1xf32>
      %cst_62 = arith.constant 1.600000e+01 : f32
      %180 = vector.broadcast %cst_62 : f32 to vector<64x1xf32>
      %181 = arith.divf %179, %180 : vector<64x1xf32>
      %cst_63 = arith.constant 9.99999974E-6 : f32
      %182 = vector.broadcast %cst_63 : f32 to vector<64x1xf32>
      %183 = arith.addf %181, %182 : vector<64x1xf32>
      %184 = math.rsqrt %183 : vector<64x1xf32>
      %185 = vector.broadcast %184 : vector<64x1xf32> to vector<64x16xf32>
      %186 = arith.mulf %176, %185 : vector<64x16xf32>
      %187 = vector.broadcast %14 : vector<1x16xf32> to vector<64x16xf32>
      %188 = arith.mulf %186, %187 : vector<64x16xf32>
      %189 = vector.broadcast %15 : vector<1x16xf32> to vector<64x16xf32>
      %190 = arith.addf %188, %189 : vector<64x16xf32>
      %c0_64 = arith.constant 0 : index
      %c112 = arith.constant 112 : index
      %191 = vector.load %arg7[%c0_64, %c112] : memref<64x128xf32, #tpu.memory_space<vmem>>, vector<64x16xf32>
      tpu.vector_store %arg7[%c0_64, %c112], %190 {strides = array<i32>} : memref<64x128xf32, #tpu.memory_space<vmem>>, vector<64x16xf32>,
    } else {
    }
    return
  }
  func.func @transform_0(%arg0: i32, %arg1: i32, %arg2: i32) -> (i32, i32) {
    %c0_i32 = arith.constant 0 : i32
    return %arg1, %arg2 : i32, i32
  }
  func.func @transform_1(%arg0: i32, %arg1: i32, %arg2: i32) -> (i32, i32) {
    %c0_i32 = arith.constant 0 : i32
    return %arg2, %arg0 : i32, i32
  }
  func.func @transform_2(%arg0: i32, %arg1: i32, %arg2: i32) -> (i32, i32) {
    %c0_i32 = arith.constant 0 : i32
    %c0_i32_0 = arith.constant 0 : i32
    %c0_i32_1 = arith.constant 0 : i32
    return %c0_i32, %c0_i32_0 : i32, i32
  }
  func.func @transform_3(%arg0: i32, %arg1: i32, %arg2: i32) -> (i32, i32) {
    %c0_i32 = arith.constant 0 : i32
    %c0_i32_0 = arith.constant 0 : i32
    %c0_i32_1 = arith.constant 0 : i32
    return %c0_i32, %c0_i32_0 : i32, i32
  }
  func.func @transform_4(%arg0: i32, %arg1: i32, %arg2: i32) -> (i32, i32) {
    %c0_i32 = arith.constant 0 : i32
    return %arg1, %arg0 : i32, i32
  }
}

</mosaic_0001>

<llo_original>
// kernel: tpu_custom_call.1
$region0: #{tpu_custom_call.1}
  #allocation0 [shape = 'u32[]', space=smem, size = 0x4, offset = 0x4, fixed_abs, tag = 'smem constant byte address 0x4 - core index']
  #allocation1 [shape = 'u32[72,128]{1,0:T(1,128)}', space=vmem, size = 0x9000, scoped, tag = 'internal scratch']
  %s0 = inlined_call_operand.vmem [shape: f32[128,32], index: 0, kind: input, shape index: {}]
  %s1 = inlined_call_operand.vmem [shape: bf16[32,128], index: 1, kind: input, shape index: {}]
  %s2 = inlined_call_operand.vmem [shape: f32[1,16], index: 2, kind: input, shape index: {}]
  %s3 = inlined_call_operand.vmem [shape: f32[1,16], index: 3, kind: input, shape index: {}]
  %s4 = inlined_call_operand.hbm [shape: f32[128,128], index: 4, kind: output, shape index: {}]
  %s5 = sld [smem:[#allocation0]]
  $region57: #{tpu_custom_call.1} parent=0
    _
  %s7 = ssub.s32 1, %s5
  %s8 = scalar_select 0, %s7, %s5
  $region1: #{tpu_custom_call.1} parent=0
    #allocation2 [shape = 'u8[65536]{0}', space=vmem, size = 0x10000, scoped, tag = 'output window, operand 0']
    #allocation3 [shape = 's32[2]{0}', space=sflag, size = 0x8, scoped, tag = 'scoped memory for tpu_custom_call.1']
    %9 = vsyncpa [#allocation3], 0
    %s10 = scalar_lea.sflag [#allocation3], 1
    %11 = vsyncpa %s10, 0
    loop: start=0, step=1, limit=4
    $region2: #{tpu_custom_call.1} parent=1 // loop_pre_header
      _
    $region3: #{tpu_custom_call.1} parent=1 // loop_header
      %s13 = sphi 0, %s17
      %p14 = scmp.ge.s32.totalorder %s13, 4
      %s20 = sphi 0, %s39
      %s21 = sphi 0, %s35
      %s22 = sphi 0, %s31
      %s23 = sphi 0, %s20
      %s24 = sphi 0, %s21
      %s25 = sphi 0, %s22
      %s26 = sphi 0, %s23
      %s27 = sphi 0, %s24
      %s28 = sphi 0, %s25
      %s44 = sphi 0, %s46
      %s47 = sphi 0, %s44
      %s48 = sphi 0, %s47
      %s64 = sphi 0, %s48
      %s72 = sphi 0, %s74
      %s75 = sphi 0, %s72
      %s76 = sphi 0, %s75
      %s92 = sphi 0, %s76
      %s96 = sphi 0, %s96
      %s98 = sphi 0, %s96
      %s99 = sphi 0, %s98
      %s113 = sphi 0, %s99
      %s117 = sphi 0, %s117
      %s119 = sphi 0, %s117
      %s120 = sphi 0, %s119
      %s134 = sphi 0, %s120
      %s142 = sphi 0, %s144
      %s145 = sphi 0, %s142
      %s146 = sphi 0, %s145
      %s162 = sphi 0, %s146
    $region4: #{tpu_custom_call.1} parent=1 // loop_header_branch
      %16 = sbr.rel (%p14) target = $region8
    $region5: #{tpu_custom_call.1} parent=1 // loop_body
      %s18 = ssub.s32 %s13, 1
      %s19 = ssub.s32 %s13, 2
      %s29 = sadd.s32 1, %s22
      %p30 = scmp.ge.s32.totalorder %s29, 1
      %s31 = scalar_select %p30, 0, %s29
      %s32 = sadd.s32 1, %s21
      %s33 = scalar_select %p30, %s32, %s21
      %p34 = scmp.ge.s32.totalorder %s33, 2
      %s35 = scalar_select %p34, 0, %s33
      %s36 = sadd.s32 1, %s20
      %s37 = scalar_select %p34, %s36, %s20
      %p38 = scmp.ge.s32.totalorder %s37, 1
      %s39 = scalar_select %p38, 0, %s37
      %s40 = ssub.s32 %s21, %s35
      %s41 = ssub.s32 %s22, %s31
      %s42 = sor.u32 %s40, %s41
      %p43 = scmp.eq.s32.totalorder %s42, 0
      %s45 = sadd.s32 %s44, 1
      %s46 = scalar_select %p43, %s44, %s45
      %p49 = pneg %p43
      %p50 = scmp.eq.s32.totalorder %s13, 1
      %p51 = por %p49, %p50
      %p52 = scmp.ne.s32.totalorder %s44, %s47
      %p53 = scmp.eq.s32.totalorder %s13, 0
      %p54 = por %p52, %p53
      %p55 = scmp.ne.s32.totalorder %s44, %s47
      %p56 = scmp.eq.s32.totalorder %s18, 1
      %p57 = por %p55, %p56
      %p58 = scmp.ne.s32.totalorder %s47, %s48
      %p59 = scmp.eq.s32.totalorder %s18, 0
      %p60 = por %p58, %p59
      %p61 = scmp.ne.s32.totalorder %s47, %s48
      %p62 = scmp.eq.s32.totalorder %s19, 1
      %p63 = por %p61, %p62
      %p65 = scmp.ne.s32.totalorder %s48, %s64
      %p66 = scmp.eq.s32.totalorder %s19, 0
      %p67 = por %p65, %p66
      %s68 = ssub.s32 %s22, %s31
      %s69 = ssub.s32 %s20, %s39
      %s70 = sor.u32 %s68, %s69
      %p71 = scmp.eq.s32.totalorder %s70, 0
      %s73 = sadd.s32 %s72, 1
      %s74 = scalar_select %p71, %s72, %s73
      %p77 = pneg %p71
      %p78 = scmp.eq.s32.totalorder %s13, 1
      %p79 = por %p77, %p78
      %p80 = scmp.ne.s32.totalorder %s72, %s75
      %p81 = scmp.eq.s32.totalorder %s13, 0
      %p82 = por %p80, %p81
      %p83 = scmp.ne.s32.totalorder %s72, %s75
      %p84 = scmp.eq.s32.totalorder %s18, 1
      %p85 = por %p83, %p84
      %p86 = scmp.ne.s32.totalorder %s75, %s76
      %p87 = scmp.eq.s32.totalorder %s18, 0
      %p88 = por %p86, %p87
      %p89 = scmp.ne.s32.totalorder %s75, %s76
      %p90 = scmp.eq.s32.totalorder %s19, 1
      %p91 = por %p89, %p90
      %p93 = scmp.ne.s32.totalorder %s76, %s92
      %p94 = scmp.eq.s32.totalorder %s19, 0
      %p95 = por %p93, %p94
      %s97 = sadd.s32 %s96, 1
      %p100 = scmp.eq.s32.totalorder %s13, 1
      %p101 = scmp.ne.s32.totalorder %s96, %s98
      %p102 = scmp.eq.s32.totalorder %s13, 0
      %p103 = por %p101, %p102
      %p104 = scmp.ne.s32.totalorder %s96, %s98
      %p105 = scmp.eq.s32.totalorder %s18, 1
      %p106 = por %p104, %p105
      %p107 = scmp.ne.s32.totalorder %s98, %s99
      %p108 = scmp.eq.s32.totalorder %s18, 0
      %p109 = por %p107, %p108
      %p110 = scmp.ne.s32.totalorder %s98, %s99
      %p111 = scmp.eq.s32.totalorder %s19, 1
      %p112 = por %p110, %p111
      %p114 = scmp.ne.s32.totalorder %s99, %s113
      %p115 = scmp.eq.s32.totalorder %s19, 0
      %p116 = por %p114, %p115
      %s118 = sadd.s32 %s117, 1
      %p121 = scmp.eq.s32.totalorder %s13, 1
      %p122 = scmp.ne.s32.totalorder %s117, %s119
      %p123 = scmp.eq.s32.totalorder %s13, 0
      %p124 = por %p122, %p123
      %p125 = scmp.ne.s32.totalorder %s117, %s119
      %p126 = scmp.eq.s32.totalorder %s18, 1
      %p127 = por %p125, %p126
      %p128 = scmp.ne.s32.totalorder %s119, %s120
      %p129 = scmp.eq.s32.totalorder %s18, 0
      %p130 = por %p128, %p129
      %p131 = scmp.ne.s32.totalorder %s119, %s120
      %p132 = scmp.eq.s32.totalorder %s19, 1
      %p133 = por %p131, %p132
      %p135 = scmp.ne.s32.totalorder %s120, %s134
      %p136 = scmp.eq.s32.totalorder %s19, 0
      %p137 = por %p135, %p136
      %s138 = ssub.s32 %s21, %s35
      %s139 = ssub.s32 %s20, %s39
      %s140 = sor.u32 %s138, %s139
      %p141 = scmp.eq.s32.totalorder %s140, 0
      %s143 = sadd.s32 %s142, 1
      %s144 = scalar_select %p141, %s142, %s143
      %p147 = pneg %p141
      %p148 = scmp.eq.s32.totalorder %s13, 1
      %p149 = por %p147, %p148
      %p150 = scmp.ne.s32.totalorder %s142, %s145
      %p151 = scmp.eq.s32.totalorder %s13, 0
      %p152 = por %p150, %p151
      %p153 = scmp.ne.s32.totalorder %s142, %s145
      %p154 = scmp.eq.s32.totalorder %s18, 1
      %p155 = por %p153, %p154
      %p156 = scmp.ne.s32.totalorder %s145, %s146
      %p157 = scmp.eq.s32.totalorder %s18, 0
      %p158 = por %p156, %p157
      %p159 = scmp.ne.s32.totalorder %s145, %s146
      %p160 = scmp.eq.s32.totalorder %s19, 1
      %p161 = por %p159, %p160
      %p163 = scmp.ne.s32.totalorder %s146, %s162
      %p164 = scmp.eq.s32.totalorder %s19, 0
      %p165 = por %p163, %p164
      %p166 = scmp.le.s32.totalorder 1, %s13
      %p167 = scmp.lt.s32.totalorder %s13, 3
      %p168 = pnand %p166, %p167
      %p169 = pneg %p168
      // Predicated region
      $region9: #{tpu_custom_call.1} parent=5 // pred_check
        _
      $region10: #{tpu_custom_call.1} parent=5 // pred_check_branch
        %171 = sbr.rel (%p168) target = $region12
      $region11: #{tpu_custom_call.1} parent=5 // pred_region
        %s172 = ssub.s32 %s13, 1
        // Predicated region
        $region13: #{tpu_custom_call.1} parent=11 // pred_check
          %p173 = pneg %p88
        $region14: #{tpu_custom_call.1} parent=11 // pred_check_branch
          %175 = sbr.rel (%p173) target = $region16
        $region15: #{tpu_custom_call.1} parent=11 // pred_region
          %s176 = smul.u32 4, %s25
          %p177 = scmp.lt.s32.totalorder %s176, 3
          %s178 = scalar_select %p177, %s176, 3
          %p179 = scmp.lt.s32.totalorder %s23, 0
          %s180 = scalar_select %p179, %s23, 0
          %s181 = sadd.s32 %s180, %s178
          %s182 = smul.addr %s181, 4
          %s183 = scalar_lea.vmem %s1, %s182
          %s184 = smul.u32 4, %s25
        $region16: #{tpu_custom_call.1} parent=11 // pred_fallthru
          _
        // Predicated region
        $region17: #{tpu_custom_call.1} parent=11 // pred_check
          %p185 = pneg %p109
        $region18: #{tpu_custom_call.1} parent=11 // pred_check_branch
          %187 = sbr.rel (%p185) target = $region20
        $region19: #{tpu_custom_call.1} parent=11 // pred_region
          _
        $region20: #{tpu_custom_call.1} parent=11 // pred_fallthru
          _
        // Predicated region
        $region21: #{tpu_custom_call.1} parent=11 // pred_check
          %p188 = pneg %p130
        $region22: #{tpu_custom_call.1} parent=11 // pred_check_branch
          %190 = sbr.rel (%p188) target = $region24
        $region23: #{tpu_custom_call.1} parent=11 // pred_region
          _
        $region24: #{tpu_custom_call.1} parent=11 // pred_fallthru
          _
      $region12: #{tpu_custom_call.1} parent=5 // pred_fallthru
        _
      %p191 = scmp.lt.s32.totalorder %s13, 2
      // Predicated region
      $region25: #{tpu_custom_call.1} parent=5 // pred_check
        %p192 = pneg %p191
      $region26: #{tpu_custom_call.1} parent=5 // pred_check_branch
        %194 = sbr.rel (%p192) target = $region28
      $region27: #{tpu_custom_call.1} parent=5 // pred_region
        // Predicated region
        $region29: #{tpu_custom_call.1} parent=27 // pred_check
          %p195 = pneg %p54
        $region30: #{tpu_custom_call.1} parent=27 // pred_check_branch
          %197 = sbr.rel (%p195) target = $region32
        $region31: #{tpu_custom_call.1} parent=27 // pred_region
          %s198 = smul.u32 8, %s21
          %p199 = scmp.lt.s32.totalorder %s198, 15
          %s200 = scalar_select %p199, %s198, 15
          %p201 = scmp.lt.s32.totalorder %s22, 0
          %s202 = scalar_select %p201, %s22, 0
          %s203 = sadd.s32 %s202, %s200
          %s204 = smul.addr %s203, 8
          %s205 = scalar_lea.vmem %s0, %s204
          %s206 = smul.u32 8, %s21
        $region32: #{tpu_custom_call.1} parent=27 // pred_fallthru
          _
      $region28: #{tpu_custom_call.1} parent=5 // pred_fallthru
        _
      %p207 = scmp.le.s32.totalorder 1, %s13
      %p208 = scmp.lt.s32.totalorder %s13, 3
      %p209 = pnand %p207, %p208
      %p210 = pneg %p209
      // Predicated region
      $region33: #{tpu_custom_call.1} parent=5 // pred_check
        _
      $region34: #{tpu_custom_call.1} parent=5 // pred_check_branch
        %212 = sbr.rel (%p209) target = $region36
      $region35: #{tpu_custom_call.1} parent=5 // pred_region
        %s213 = ssub.s32 %s13, 1
        %s214 = smul.u32 8, %s24
        %p215 = scmp.lt.s32.totalorder %s214, 15
        %s216 = scalar_select %p215, %s214, 15
        %p217 = scmp.lt.s32.totalorder %s25, 0
        %s218 = scalar_select %p217, %s25, 0
        %s219 = sadd.s32 %s218, %s216
        %s220 = smul.addr %s219, 8
        %s221 = scalar_lea.vmem %s0, %s220
        %p222 = pneg %p60
        %p223 = pneg %p57
        %s224 = smul.u32 4, %s25
        %p225 = scmp.lt.s32.totalorder %s224, 3
        %s226 = scalar_select %p225, %s224, 3
        %p227 = scmp.lt.s32.totalorder %s23, 0
        %s228 = scalar_select %p227, %s23, 0
        %s229 = sadd.s32 %s228, %s226
        %s230 = smul.addr %s229, 4
        %s231 = scalar_lea.vmem %s1, %s230
        %p232 = pneg %p88
        %p233 = pneg %p85
        %p234 = pneg %p109
        %p235 = pneg %p106
        %p236 = pneg %p130
        %p237 = pneg %p127
        %p238 = pneg %p158
        %p239 = pneg %p155
        %s240 = sand.u32 %s145, 1
        %s241 = scalar_lea.sflag [#allocation3], %s240
        %s242 = sand.u32 %s145, 1
        %s243 = smul.addr %s242, 64
        %s244 = scalar_lea.vmem [#allocation2], %s243
        %s245 = smul.u32 8, %s24
        %p246 = scmp.lt.s32.totalorder %s245, 15
        %s247 = scalar_select %p246, %s245, 15
        %p248 = scmp.lt.s32.totalorder %s25, 0
        %s249 = scalar_select %p248, %s25, 0
        %s250 = sadd.s32 %s249, %s247
        %s251 = smul.addr %s250, 8
        %s252 = scalar_lea.vmem %s0, %s251
        %s253 = smul.u32 8, %s24
        %s254 = smul.u32 4, %s25
        %p255 = scmp.lt.s32.totalorder %s254, 3
        %s256 = scalar_select %p255, %s254, 3
        %p257 = scmp.lt.s32.totalorder %s23, 0
        %s258 = scalar_select %p257, %s23, 0
        %s259 = sadd.s32 %s258, %s256
        %s260 = smul.addr %s259, 4
        %s261 = scalar_lea.vmem %s1, %s260
        %s262 = smul.u32 4, %s25
        %s263 = smul.u32 8, %s24
        %p265 = scmp.eq.s32.totalorder %s25, 0
        // Predicated region
        $region37: #{tpu_custom_call.1} parent=35 // pred_check
          %p266 = pneg %p265
        $region38: #{tpu_custom_call.1} parent=35 // pred_check_branch
          %268 = sbr.rel (%p266) target = $region40
        $region39: #{tpu_custom_call.1} parent=35 // pred_region
          %269 = vst [vmem:[%s244] sm:$0xff] 0.0
          %270 = vst [vmem:[%s244 + $0x8] sm:$0xff] 0.0
          %271 = vst [vmem:[%s244 + $0x10] sm:$0xff] 0.0
          %272 = vst [vmem:[%s244 + $0x18] sm:$0xff] 0.0
          %273 = vst [vmem:[%s244 + $0x20] sm:$0xff] 0.0
          %274 = vst [vmem:[%s244 + $0x28] sm:$0xff] 0.0
          %275 = vst [vmem:[%s244 + $0x30] sm:$0xff] 0.0
          %276 = vst [vmem:[%s244 + $0x38] sm:$0xff] 0.0
        $region40: #{tpu_custom_call.1} parent=35 // pred_fallthru
          _
        %v277 = vld [vmem:[%s244] sm:$0xff]
        %v278 = vld [vmem:[%s244 + $0x8] sm:$0xff]
        %v279 = vld [vmem:[%s244 + $0x10] sm:$0xff]
        %v280 = vld [vmem:[%s244 + $0x18] sm:$0xff]
        %v281 = vld [vmem:[%s244 + $0x20] sm:$0xff]
        %v282 = vld [vmem:[%s244 + $0x28] sm:$0xff]
        %v283 = vld [vmem:[%s244 + $0x30] sm:$0xff]
        %v284 = vld [vmem:[%s244 + $0x38] sm:$0xff]
        %v285 = vld [vmem:[%s252] sm:$0xff]
        %v286 = vld [vmem:[%s252 + $0x8] sm:$0xff]
        %v287 = vld [vmem:[%s252 + $0x10] sm:$0xff]
        %v288 = vld [vmem:[%s252 + $0x18] sm:$0xff]
        %v289 = vld [vmem:[%s252 + $0x20] sm:$0xff]
        %v290 = vld [vmem:[%s252 + $0x28] sm:$0xff]
        %v291 = vld [vmem:[%s252 + $0x30] sm:$0xff]
        %v292 = vld [vmem:[%s252 + $0x38] sm:$0xff]
        %v293 = vpack.c.bf16 %v286, %v285
        %v294 = vpack.c.bf16 %v288, %v287
        %v295 = vpack.c.bf16 %v290, %v289
        %v296 = vpack.c.bf16 %v292, %v291
        %v297 = vld [vmem:[%s261] sm:$0xf]
        %v298 = vld [vmem:[%s261 + $0x4] sm:$0xf]
        %v299 = vld [vmem:[%s261 + $0x8] sm:$0xf]
        %v300 = vld [vmem:[%s261 + $0xc] sm:$0xf]
        %v305 = vunpack.c.l.b16 %v297
        %v306 = vunpack.c.l.b16 %v298
        %v307 = vunpack.c.l.b16 %v299
        %v308 = vunpack.c.l.b16 %v300
        %v309 = vpack.c.b16 %v306, %v305
        %v310 = vpack.c.b16 %v308, %v307
        %vm313 = vcmask 261120
        %v315 = vsel %vm313, %v293, 0
        %v318 = vsel %vm313, %v294, 0
        %v321 = vsel %vm313, %v295, 0
        %v324 = vsel %vm313, %v296, 0
        %326 = vmatpush.bf16.msra.mxu0 0
        %327 = vmatpush.bf16.msra.mxu0 0
        %328 = vmatpush.bf16.msra.mxu0 0
        %329 = vmatpush.bf16.msra.mxu0 0
        %330 = vmatpush.bf16.msra.mxu0 0
        %331 = vmatpush.bf16.msra.mxu0 0
        %332 = vmatpush.bf16.msra.mxu0 %v310
        %333 = vmatpush.bf16.msra.mxu0 %v309
        %334 = vmatmul.bf16.gmra.mxu0 %v315
        %v335 = vpop.f32.mrf.mxu0
        %v336 = vadd.f32 0.0, %v335
        %v337 = vpop.f32.mrf.mxu0
        %v338 = vadd.f32 0.0, %v337
        %339 = vmatmul.bf16.gmra.mxu0 %v318
        %v340 = vpop.f32.mrf.mxu0
        %v341 = vadd.f32 0.0, %v340
        %v342 = vpop.f32.mrf.mxu0
        %v343 = vadd.f32 0.0, %v342
        %344 = vmatmul.bf16.gmra.mxu0 %v321
        %v345 = vpop.f32.mrf.mxu0
        %v346 = vadd.f32 0.0, %v345
        %v347 = vpop.f32.mrf.mxu0
        %v348 = vadd.f32 0.0, %v347
        %349 = vmatmul.bf16.gmra.mxu0 %v324
        %v350 = vpop.f32.mrf.mxu0
        %v351 = vadd.f32 0.0, %v350
        %v352 = vpop.f32.mrf.mxu0
        %v353 = vadd.f32 0.0, %v352
        %354 = vdwg.mxu0
        %v355 = vadd.f32 %v277, %v336
        %v356 = vadd.f32 %v278, %v338
        %v357 = vadd.f32 %v279, %v341
        %v358 = vadd.f32 %v280, %v343
        %v359 = vadd.f32 %v281, %v346
        %v360 = vadd.f32 %v282, %v348
        %v361 = vadd.f32 %v283, %v351
        %v362 = vadd.f32 %v284, %v353
        %363 = vst [vmem:[%s244] sm:$0xff] %v355
        %364 = vst [vmem:[%s244 + $0x8] sm:$0xff] %v356
        %365 = vst [vmem:[%s244 + $0x10] sm:$0xff] %v357
        %366 = vst [vmem:[%s244 + $0x18] sm:$0xff] %v358
        %367 = vst [vmem:[%s244 + $0x20] sm:$0xff] %v359
        %368 = vst [vmem:[%s244 + $0x28] sm:$0xff] %v360
        %369 = vst [vmem:[%s244 + $0x30] sm:$0xff] %v361
        %370 = vst [vmem:[%s244 + $0x38] sm:$0xff] %v362
        // Predicated region
        $region41: #{tpu_custom_call.1} parent=35 // pred_check
          %p371 = pneg %p265
        $region42: #{tpu_custom_call.1} parent=35 // pred_check_branch
          %373 = sbr.rel (%p371) target = $region44
        $region43: #{tpu_custom_call.1} parent=35 // pred_region
          %v374 = vld [vmem:[%s244] sm:$0xff]
          %v375 = vld [vmem:[%s244 + $0x8] sm:$0xff]
          %v376 = vld [vmem:[%s244 + $0x10] sm:$0xff]
          %v377 = vld [vmem:[%s244 + $0x18] sm:$0xff]
          %v378 = vld [vmem:[%s244 + $0x20] sm:$0xff]
          %v379 = vld [vmem:[%s244 + $0x28] sm:$0xff]
          %v380 = vld [vmem:[%s244 + $0x30] sm:$0xff]
          %v381 = vld [vmem:[%s244 + $0x38] sm:$0xff]
          %v382 = vld [vmem:[%s2] sm:$0x1]
          %v383 = vld [vmem:[%s3] sm:$0x1]
          %vm384 = vcmask 130048
          %v385 = vsel %vm384, %v374, 0.0
          %386 = vadd.xlane.f32.xlu0 %v385
          %v387 = vpop.xlane.xlu0 %386
          %v388 = vsel %vm384, %v375, 0.0
          %389 = vadd.xlane.f32.xlu0 %v388
          %v390 = vpop.xlane.xlu0 %389
          %v391 = vsel %vm384, %v376, 0.0
          %392 = vadd.xlane.f32.xlu0 %v391
          %v393 = vpop.xlane.xlu0 %392
          %v394 = vsel %vm384, %v377, 0.0
          %395 = vadd.xlane.f32.xlu0 %v394
          %v396 = vpop.xlane.xlu0 %395
          %v397 = vsel %vm384, %v378, 0.0
          %398 = vadd.xlane.f32.xlu0 %v397
          %v399 = vpop.xlane.xlu0 %398
          %v400 = vsel %vm384, %v379, 0.0
          %401 = vadd.xlane.f32.xlu0 %v400
          %v402 = vpop.xlane.xlu0 %401
          %v403 = vsel %vm384, %v380, 0.0
          %404 = vadd.xlane.f32.xlu0 %v403
          %v405 = vpop.xlane.xlu0 %404
          %v406 = vsel %vm384, %v381, 0.0
          %407 = vadd.xlane.f32.xlu0 %v406
          %v408 = vpop.xlane.xlu0 %407
          %v409 = vrcp.pop 16.0
          %v410 = vmul.f32 16.0, %v409
          %v411 = vsub.f32 1.0, %v410
          %v412 = vmul.f32 %v409, %v411
          %v413 = vadd.f32 %v409, %v412
          %vm414 = vweird.f32 %v409
          %v415 = vsel %vm414, %v409, %v413
          %v416 = vmul.f32 %v387, %v415
          %v417 = vmul.f32 %v390, %v415
          %v418 = vmul.f32 %v393, %v415
          %v419 = vmul.f32 %v396, %v415
          %v420 = vmul.f32 %v399, %v415
          %v421 = vmul.f32 %v402, %v415
          %v422 = vmul.f32 %v405, %v415
          %v423 = vmul.f32 %v408, %v415
          %v424 = vsub.f32 %v374, %v416
          %v425 = vsub.f32 %v375, %v417
          %v426 = vsub.f32 %v376, %v418
          %v427 = vsub.f32 %v377, %v419
          %v428 = vsub.f32 %v378, %v420
          %v429 = vsub.f32 %v379, %v421
          %v430 = vsub.f32 %v380, %v422
          %v431 = vsub.f32 %v381, %v423
          %v432 = vmul.f32 %v424, %v424
          %v433 = vmul.f32 %v425, %v425
          %v434 = vmul.f32 %v426, %v426
          %v435 = vmul.f32 %v427, %v427
          %v436 = vmul.f32 %v428, %v428
          %v437 = vmul.f32 %v429, %v429
          %v438 = vmul.f32 %v430, %v430
          %v439 = vmul.f32 %v431, %v431
          %v440 = vsel %vm384, %v432, 0.0
          %441 = vadd.xlane.f32.xlu0 %v440
          %v442 = vpop.xlane.xlu0 %441
          %v443 = vsel %vm384, %v433, 0.0
          %444 = vadd.xlane.f32.xlu0 %v443
          %v445 = vpop.xlane.xlu0 %444
          %v446 = vsel %vm384, %v434, 0.0
          %447 = vadd.xlane.f32.xlu0 %v446
          %v448 = vpop.xlane.xlu0 %447
          %v449 = vsel %vm384, %v435, 0.0
          %450 = vadd.xlane.f32.xlu0 %v449
          %v451 = vpop.xlane.xlu0 %450
          %v452 = vsel %vm384, %v436, 0.0
          %453 = vadd.xlane.f32.xlu0 %v452
          %v454 = vpop.xlane.xlu0 %453
          %v455 = vsel %vm384, %v437, 0.0
          %456 = vadd.xlane.f32.xlu0 %v455
          %v457 = vpop.xlane.xlu0 %456
          %v458 = vsel %vm384, %v438, 0.0
          %459 = vadd.xlane.f32.xlu0 %v458
          %v460 = vpop.xlane.xlu0 %459
          %v461 = vsel %vm384, %v439, 0.0
          %462 = vadd.xlane.f32.xlu0 %v461
          %v463 = vpop.xlane.xlu0 %462
          %v464 = vmul.f32 %v442, %v415
          %v465 = vmul.f32 %v445, %v415
          %v466 = vmul.f32 %v448, %v415
          %v467 = vmul.f32 %v451, %v415
          %v468 = vmul.f32 %v454, %v415
          %v469 = vmul.f32 %v457, %v415
          %v470 = vmul.f32 %v460, %v415
          %v471 = vmul.f32 %v463, %v415
          %v472 = vadd.f32 %v464, 1e-05
          %v473 = vadd.f32 %v465, 1e-05
          %v474 = vadd.f32 %v466, 1e-05
          %v475 = vadd.f32 %v467, 1e-05
          %v476 = vadd.f32 %v468, 1e-05
          %v477 = vadd.f32 %v469, 1e-05
          %v478 = vadd.f32 %v470, 1e-05
          %v479 = vadd.f32 %v471, 1e-05
          %v480 = vrsqrt.pop %v472
          %v481 = vmul.f32 %v480, %v472
          %v482 = vmul.f32 %v481, %v480
          %v483 = vmul.f32 0.5, %v482
          %v484 = vsub.f32 1.5, %v483
          %v485 = vmul.f32 %v480, %v484
          %vm486 = vweird.f32 %v472
          %vm487 = vweird.f32 %v480
          %vm488 = vmor %vm486, %vm487
          %v489 = vsel %vm488, %v480, %v485
          %v490 = vrsqrt.pop %v473
          %v491 = vmul.f32 %v490, %v473
          %v492 = vmul.f32 %v491, %v490
          %v493 = vmul.f32 0.5, %v492
          %v494 = vsub.f32 1.5, %v493
          %v495 = vmul.f32 %v490, %v494
          %vm496 = vweird.f32 %v473
          %vm497 = vweird.f32 %v490
          %vm498 = vmor %vm496, %vm497
          %v499 = vsel %vm498, %v490, %v495
          %v500 = vrsqrt.pop %v474
          %v501 = vmul.f32 %v500, %v474
          %v502 = vmul.f32 %v501, %v500
          %v503 = vmul.f32 0.5, %v502
          %v504 = vsub.f32 1.5, %v503
          %v505 = vmul.f32 %v500, %v504
          %vm506 = vweird.f32 %v474
          %vm507 = vweird.f32 %v500
          %vm508 = vmor %vm506, %vm507
          %v509 = vsel %vm508, %v500, %v505
          %v510 = vrsqrt.pop %v475
          %v511 = vmul.f32 %v510, %v475
          %v512 = vmul.f32 %v511, %v510
          %v513 = vmul.f32 0.5, %v512
          %v514 = vsub.f32 1.5, %v513
          %v515 = vmul.f32 %v510, %v514
          %vm516 = vweird.f32 %v475
          %vm517 = vweird.f32 %v510
          %vm518 = vmor %vm516, %vm517
          %v519 = vsel %vm518, %v510, %v515
          %v520 = vrsqrt.pop %v476
          %v521 = vmul.f32 %v520, %v476
          %v522 = vmul.f32 %v521, %v520
          %v523 = vmul.f32 0.5, %v522
          %v524 = vsub.f32 1.5, %v523
          %v525 = vmul.f32 %v520, %v524
          %vm526 = vweird.f32 %v476
          %vm527 = vweird.f32 %v520
          %vm528 = vmor %vm526, %vm527
          %v529 = vsel %vm528, %v520, %v525
          %v530 = vrsqrt.pop %v477
          %v531 = vmul.f32 %v530, %v477
          %v532 = vmul.f32 %v531, %v530
          %v533 = vmul.f32 0.5, %v532
          %v534 = vsub.f32 1.5, %v533
          %v535 = vmul.f32 %v530, %v534
          %vm536 = vweird.f32 %v477
          %vm537 = vweird.f32 %v530
          %vm538 = vmor %vm536, %vm537
          %v539 = vsel %vm538, %v530, %v535
          %v540 = vrsqrt.pop %v478
          %v541 = vmul.f32 %v540, %v478
          %v542 = vmul.f32 %v541, %v540
          %v543 = vmul.f32 0.5, %v542
          %v544 = vsub.f32 1.5, %v543
          %v545 = vmul.f32 %v540, %v544
          %vm546 = vweird.f32 %v478
          %vm547 = vweird.f32 %v540
          %vm548 = vmor %vm546, %vm547
          %v549 = vsel %vm548, %v540, %v545
          %v550 = vrsqrt.pop %v479
          %v551 = vmul.f32 %v550, %v479
          %v552 = vmul.f32 %v551, %v550
          %v553 = vmul.f32 0.5, %v552
          %v554 = vsub.f32 1.5, %v553
          %v555 = vmul.f32 %v550, %v554
          %vm556 = vweird.f32 %v479
          %vm557 = vweird.f32 %v550
          %vm558 = vmor %vm556, %vm557
          %v559 = vsel %vm558, %v550, %v555
          %v560 = vmul.f32 %v424, %v489
          %v561 = vmul.f32 %v425, %v499
          %v562 = vmul.f32 %v426, %v509
          %v563 = vmul.f32 %v427, %v519
          %v564 = vmul.f32 %v428, %v529
          %v565 = vmul.f32 %v429, %v539
          %v566 = vmul.f32 %v430, %v549
          %v567 = vmul.f32 %v431, %v559
          %v569 = vperm.slane %v382, 0
          %v571 = vmul.f32 %v560, %v569
          %v572 = vmul.f32 %v561, %v569
          %v573 = vmul.f32 %v562, %v569
          %v574 = vmul.f32 %v563, %v569
          %v575 = vmul.f32 %v564, %v569
          %v576 = vmul.f32 %v565, %v569
          %v577 = vmul.f32 %v566, %v569
          %v578 = vmul.f32 %v567, %v569
          %v580 = vperm.slane %v383, 0
          %v582 = vadd.f32 %v571, %v580
          %v583 = vadd.f32 %v572, %v580
          %v584 = vadd.f32 %v573, %v580
          %v585 = vadd.f32 %v574, %v580
          %v586 = vadd.f32 %v575, %v580
          %v587 = vadd.f32 %v576, %v580
          %v588 = vadd.f32 %v577, %v580
          %v589 = vadd.f32 %v578, %v580
          %590 = vst.msk [vmem:[%s244] sm:$0xff] %vm384, %v582
          %591 = vst.msk [vmem:[%s244 + $0x8] sm:$0xff] %vm384, %v583
          %592 = vst.msk [vmem:[%s244 + $0x10] sm:$0xff] %vm384, %v584
          %593 = vst.msk [vmem:[%s244 + $0x18] sm:$0xff] %vm384, %v585
          %594 = vst.msk [vmem:[%s244 + $0x20] sm:$0xff] %vm384, %v586
          %595 = vst.msk [vmem:[%s244 + $0x28] sm:$0xff] %vm384, %v587
          %596 = vst.msk [vmem:[%s244 + $0x30] sm:$0xff] %vm384, %v588
          %597 = vst.msk [vmem:[%s244 + $0x38] sm:$0xff] %vm384, %v589
          %606 = vrot.lane.b32.xlu0 %v374, 112
          %v607 = vpop.permute.xlu0 %606
          %608 = vrot.lane.b32.xlu0 %v375, 112
          %v609 = vpop.permute.xlu0 %608
          %610 = vrot.lane.b32.xlu0 %v376, 112
          %v611 = vpop.permute.xlu0 %610
          %612 = vrot.lane.b32.xlu0 %v377, 112
          %v613 = vpop.permute.xlu0 %612
          %614 = vrot.lane.b32.xlu0 %v378, 112
          %v615 = vpop.permute.xlu0 %614
          %616 = vrot.lane.b32.xlu0 %v379, 112
          %v617 = vpop.permute.xlu0 %616
          %618 = vrot.lane.b32.xlu0 %v380, 112
          %v619 = vpop.permute.xlu0 %618
          %620 = vrot.lane.b32.xlu0 %v381, 112
          %v621 = vpop.permute.xlu0 %620
          %v630 = vsel %vm384, %v607, 0.0
          %631 = vadd.xlane.f32.xlu0 %v630
          %v632 = vpop.xlane.xlu0 %631
          %v633 = vsel %vm384, %v609, 0.0
          %634 = vadd.xlane.f32.xlu0 %v633
          %v635 = vpop.xlane.xlu0 %634
          %v636 = vsel %vm384, %v611, 0.0
          %637 = vadd.xlane.f32.xlu0 %v636
          %v638 = vpop.xlane.xlu0 %637
          %v639 = vsel %vm384, %v613, 0.0
          %640 = vadd.xlane.f32.xlu0 %v639
          %v641 = vpop.xlane.xlu0 %640
          %v642 = vsel %vm384, %v615, 0.0
          %643 = vadd.xlane.f32.xlu0 %v642
          %v644 = vpop.xlane.xlu0 %643
          %v645 = vsel %vm384, %v617, 0.0
          %646 = vadd.xlane.f32.xlu0 %v645
          %v647 = vpop.xlane.xlu0 %646
          %v648 = vsel %vm384, %v619, 0.0
          %649 = vadd.xlane.f32.xlu0 %v648
          %v650 = vpop.xlane.xlu0 %649
          %v651 = vsel %vm384, %v621, 0.0
          %652 = vadd.xlane.f32.xlu0 %v651
          %v653 = vpop.xlane.xlu0 %652
          %v654 = vmul.f32 %v632, %v415
          %v655 = vmul.f32 %v635, %v415
          %v656 = vmul.f32 %v638, %v415
          %v657 = vmul.f32 %v641, %v415
          %v658 = vmul.f32 %v644, %v415
          %v659 = vmul.f32 %v647, %v415
          %v660 = vmul.f32 %v650, %v415
          %v661 = vmul.f32 %v653, %v415
          %v662 = vsub.f32 %v374, %v654
          %v663 = vsub.f32 %v375, %v655
          %v664 = vsub.f32 %v376, %v656
          %v665 = vsub.f32 %v377, %v657
          %v666 = vsub.f32 %v378, %v658
          %v667 = vsub.f32 %v379, %v659
          %v668 = vsub.f32 %v380, %v660
          %v669 = vsub.f32 %v381, %v661
          %v670 = vmul.f32 %v662, %v662
          %v671 = vmul.f32 %v663, %v663
          %v672 = vmul.f32 %v664, %v664
          %v673 = vmul.f32 %v665, %v665
          %v674 = vmul.f32 %v666, %v666
          %v675 = vmul.f32 %v667, %v667
          %v676 = vmul.f32 %v668, %v668
          %v677 = vmul.f32 %v669, %v669
          %686 = vrot.lane.b32.xlu0 %v670, 112
          %v687 = vpop.permute.xlu0 %686
          %688 = vrot.lane.b32.xlu0 %v671, 112
          %v689 = vpop.permute.xlu0 %688
          %690 = vrot.lane.b32.xlu0 %v672, 112
          %v691 = vpop.permute.xlu0 %690
          %692 = vrot.lane.b32.xlu0 %v673, 112
          %v693 = vpop.permute.xlu0 %692
          %694 = vrot.lane.b32.xlu0 %v674, 112
          %v695 = vpop.permute.xlu0 %694
          %696 = vrot.lane.b32.xlu0 %v675, 112
          %v697 = vpop.permute.xlu0 %696
          %698 = vrot.lane.b32.xlu0 %v676, 112
          %v699 = vpop.permute.xlu0 %698
          %700 = vrot.lane.b32.xlu0 %v677, 112
          %v701 = vpop.permute.xlu0 %700
          %v710 = vsel %vm384, %v687, 0.0
          %711 = vadd.xlane.f32.xlu0 %v710
          %v712 = vpop.xlane.xlu0 %711
          %v713 = vsel %vm384, %v689, 0.0
          %714 = vadd.xlane.f32.xlu0 %v713
          %v715 = vpop.xlane.xlu0 %714
          %v716 = vsel %vm384, %v691, 0.0
          %717 = vadd.xlane.f32.xlu0 %v716
          %v718 = vpop.xlane.xlu0 %717
          %v719 = vsel %vm384, %v693, 0.0
          %720 = vadd.xlane.f32.xlu0 %v719
          %v721 = vpop.xlane.xlu0 %720
          %v722 = vsel %vm384, %v695, 0.0
          %723 = vadd.xlane.f32.xlu0 %v722
          %v724 = vpop.xlane.xlu0 %723
          %v725 = vsel %vm384, %v697, 0.0
          %726 = vadd.xlane.f32.xlu0 %v725
          %v727 = vpop.xlane.xlu0 %726
          %v728 = vsel %vm384, %v699, 0.0
          %729 = vadd.xlane.f32.xlu0 %v728
          %v730 = vpop.xlane.xlu0 %729
          %v731 = vsel %vm384, %v701, 0.0
          %732 = vadd.xlane.f32.xlu0 %v731
          %v733 = vpop.xlane.xlu0 %732
          %v734 = vmul.f32 %v712, %v415
          %v735 = vmul.f32 %v715, %v415
          %v736 = vmul.f32 %v718, %v415
          %v737 = vmul.f32 %v721, %v415
          %v738 = vmul.f32 %v724, %v415
          %v739 = vmul.f32 %v727, %v415
          %v740 = vmul.f32 %v730, %v415
          %v741 = vmul.f32 %v733, %v415
          %v742 = vadd.f32 %v734, 1e-05
          %v743 = vadd.f32 %v735, 1e-05
          %v744 = vadd.f32 %v736, 1e-05
          %v745 = vadd.f32 %v737, 1e-05
          %v746 = vadd.f32 %v738, 1e-05
          %v747 = vadd.f32 %v739, 1e-05
          %v748 = vadd.f32 %v740, 1e-05
          %v749 = vadd.f32 %v741, 1e-05
          %v750 = vrsqrt.pop %v742
          %v751 = vmul.f32 %v750, %v742
          %v752 = vmul.f32 %v751, %v750
          %v753 = vmul.f32 0.5, %v752
          %v754 = vsub.f32 1.5, %v753
          %v755 = vmul.f32 %v750, %v754
          %vm756 = vweird.f32 %v742
          %vm757 = vweird.f32 %v750
          %vm758 = vmor %vm756, %vm757
          %v759 = vsel %vm758, %v750, %v755
          %v760 = vrsqrt.pop %v743
          %v761 = vmul.f32 %v760, %v743
          %v762 = vmul.f32 %v761, %v760
          %v763 = vmul.f32 0.5, %v762
          %v764 = vsub.f32 1.5, %v763
          %v765 = vmul.f32 %v760, %v764
          %vm766 = vweird.f32 %v743
          %vm767 = vweird.f32 %v760
          %vm768 = vmor %vm766, %vm767
          %v769 = vsel %vm768, %v760, %v765
          %v770 = vrsqrt.pop %v744
          %v771 = vmul.f32 %v770, %v744
          %v772 = vmul.f32 %v771, %v770
          %v773 = vmul.f32 0.5, %v772
          %v774 = vsub.f32 1.5, %v773
          %v775 = vmul.f32 %v770, %v774
          %vm776 = vweird.f32 %v744
          %vm777 = vweird.f32 %v770
          %vm778 = vmor %vm776, %vm777
          %v779 = vsel %vm778, %v770, %v775
          %v780 = vrsqrt.pop %v745
          %v781 = vmul.f32 %v780, %v745
          %v782 = vmul.f32 %v781, %v780
          %v783 = vmul.f32 0.5, %v782
          %v784 = vsub.f32 1.5, %v783
          %v785 = vmul.f32 %v780, %v784
          %vm786 = vweird.f32 %v745
          %vm787 = vweird.f32 %v780
          %vm788 = vmor %vm786, %vm787
          %v789 = vsel %vm788, %v780, %v785
          %v790 = vrsqrt.pop %v746
          %v791 = vmul.f32 %v790, %v746
          %v792 = vmul.f32 %v791, %v790
          %v793 = vmul.f32 0.5, %v792
          %v794 = vsub.f32 1.5, %v793
          %v795 = vmul.f32 %v790, %v794
          %vm796 = vweird.f32 %v746
          %vm797 = vweird.f32 %v790
          %vm798 = vmor %vm796, %vm797
          %v799 = vsel %vm798, %v790, %v795
          %v800 = vrsqrt.pop %v747
          %v801 = vmul.f32 %v800, %v747
          %v802 = vmul.f32 %v801, %v800
          %v803 = vmul.f32 0.5, %v802
          %v804 = vsub.f32 1.5, %v803
          %v805 = vmul.f32 %v800, %v804
          %vm806 = vweird.f32 %v747
          %vm807 = vweird.f32 %v800
          %vm808 = vmor %vm806, %vm807
          %v809 = vsel %vm808, %v800, %v805
          %v810 = vrsqrt.pop %v748
          %v811 = vmul.f32 %v810, %v748
          %v812 = vmul.f32 %v811, %v810
          %v813 = vmul.f32 0.5, %v812
          %v814 = vsub.f32 1.5, %v813
          %v815 = vmul.f32 %v810, %v814
          %vm816 = vweird.f32 %v748
          %vm817 = vweird.f32 %v810
          %vm818 = vmor %vm816, %vm817
          %v819 = vsel %vm818, %v810, %v815
          %v820 = vrsqrt.pop %v749
          %v821 = vmul.f32 %v820, %v749
          %v822 = vmul.f32 %v821, %v820
          %v823 = vmul.f32 0.5, %v822
          %v824 = vsub.f32 1.5, %v823
          %v825 = vmul.f32 %v820, %v824
          %vm826 = vweird.f32 %v749
          %vm827 = vweird.f32 %v820
          %vm828 = vmor %vm826, %vm827
          %v829 = vsel %vm828, %v820, %v825
          %v830 = vmul.f32 %v662, %v759
          %v831 = vmul.f32 %v663, %v769
          %v832 = vmul.f32 %v664, %v779
          %v833 = vmul.f32 %v665, %v789
          %v834 = vmul.f32 %v666, %v799
          %v835 = vmul.f32 %v667, %v809
          %v836 = vmul.f32 %v668, %v819
          %v837 = vmul.f32 %v669, %v829
          %838 = vrot.lane.b32.xlu0 %v569, 16
          %v839 = vpop.permute.xlu0 %838
          %v841 = vmul.f32 %v830, %v839
          %v842 = vmul.f32 %v831, %v839
          %v843 = vmul.f32 %v832, %v839
          %v844 = vmul.f32 %v833, %v839
          %v845 = vmul.f32 %v834, %v839
          %v846 = vmul.f32 %v835, %v839
          %v847 = vmul.f32 %v836, %v839
          %v848 = vmul.f32 %v837, %v839
          %849 = vrot.lane.b32.xlu0 %v580, 16
          %v850 = vpop.permute.xlu0 %849
          %v852 = vadd.f32 %v841, %v850
          %v853 = vadd.f32 %v842, %v850
          %v854 = vadd.f32 %v843, %v850
          %v855 = vadd.f32 %v844, %v850
          %v856 = vadd.f32 %v845, %v850
          %v857 = vadd.f32 %v846, %v850
          %v858 = vadd.f32 %v847, %v850
          %v859 = vadd.f32 %v848, %v850
          %vm860 = vcmask 261248
          %861 = vst.msk [vmem:[%s244] sm:$0xff] %vm860, %v852
          %862 = vst.msk [vmem:[%s244 + $0x8] sm:$0xff] %vm860, %v853
          %863 = vst.msk [vmem:[%s244 + $0x10] sm:$0xff] %vm860, %v854
          %864 = vst.msk [vmem:[%s244 + $0x18] sm:$0xff] %vm860, %v855
          %865 = vst.msk [vmem:[%s244 + $0x20] sm:$0xff] %vm860, %v856
          %866 = vst.msk [vmem:[%s244 + $0x28] sm:$0xff] %vm860, %v857
          %867 = vst.msk [vmem:[%s244 + $0x30] sm:$0xff] %vm860, %v858
          %868 = vst.msk [vmem:[%s244 + $0x38] sm:$0xff] %vm860, %v859
          %869 = vrot.lane.b32.xlu0 %v374, 96
          %v870 = vpop.permute.xlu0 %869
          %871 = vrot.lane.b32.xlu0 %v375, 96
          %v872 = vpop.permute.xlu0 %871
          %873 = vrot.lane.b32.xlu0 %v376, 96
          %v874 = vpop.permute.xlu0 %873
          %875 = vrot.lane.b32.xlu0 %v377, 96
          %v876 = vpop.permute.xlu0 %875
          %877 = vrot.lane.b32.xlu0 %v378, 96
          %v878 = vpop.permute.xlu0 %877
          %879 = vrot.lane.b32.xlu0 %v379, 96
          %v880 = vpop.permute.xlu0 %879
          %881 = vrot.lane.b32.xlu0 %v380, 96
          %v882 = vpop.permute.xlu0 %881
          %883 = vrot.lane.b32.xlu0 %v381, 96
          %v884 = vpop.permute.xlu0 %883
          %v893 = vsel %vm384, %v870, 0.0
          %894 = vadd.xlane.f32.xlu0 %v893
          %v895 = vpop.xlane.xlu0 %894
          %v896 = vsel %vm384, %v872, 0.0
          %897 = vadd.xlane.f32.xlu0 %v896
          %v898 = vpop.xlane.xlu0 %897
          %v899 = vsel %vm384, %v874, 0.0
          %900 = vadd.xlane.f32.xlu0 %v899
          %v901 = vpop.xlane.xlu0 %900
          %v902 = vsel %vm384, %v876, 0.0
          %903 = vadd.xlane.f32.xlu0 %v902
          %v904 = vpop.xlane.xlu0 %903
          %v905 = vsel %vm384, %v878, 0.0
          %906 = vadd.xlane.f32.xlu0 %v905
          %v907 = vpop.xlane.xlu0 %906
          %v908 = vsel %vm384, %v880, 0.0
          %909 = vadd.xlane.f32.xlu0 %v908
          %v910 = vpop.xlane.xlu0 %909
          %v911 = vsel %vm384, %v882, 0.0
          %912 = vadd.xlane.f32.xlu0 %v911
          %v913 = vpop.xlane.xlu0 %912
          %v914 = vsel %vm384, %v884, 0.0
          %915 = vadd.xlane.f32.xlu0 %v914
          %v916 = vpop.xlane.xlu0 %915
          %v917 = vmul.f32 %v895, %v415
          %v918 = vmul.f32 %v898, %v415
          %v919 = vmul.f32 %v901, %v415
          %v920 = vmul.f32 %v904, %v415
          %v921 = vmul.f32 %v907, %v415
          %v922 = vmul.f32 %v910, %v415
          %v923 = vmul.f32 %v913, %v415
          %v924 = vmul.f32 %v916, %v415
          %v925 = vsub.f32 %v374, %v917
          %v926 = vsub.f32 %v375, %v918
          %v927 = vsub.f32 %v376, %v919
          %v928 = vsub.f32 %v377, %v920
          %v929 = vsub.f32 %v378, %v921
          %v930 = vsub.f32 %v379, %v922
          %v931 = vsub.f32 %v380, %v923
          %v932 = vsub.f32 %v381, %v924
          %v933 = vmul.f32 %v925, %v925
          %v934 = vmul.f32 %v926, %v926
          %v935 = vmul.f32 %v927, %v927
          %v936 = vmul.f32 %v928, %v928
          %v937 = vmul.f32 %v929, %v929
          %v938 = vmul.f32 %v930, %v930
          %v939 = vmul.f32 %v931, %v931
          %v940 = vmul.f32 %v932, %v932
          %949 = vrot.lane.b32.xlu0 %v933, 96
          %v950 = vpop.permute.xlu0 %949
          %951 = vrot.lane.b32.xlu0 %v934, 96
          %v952 = vpop.permute.xlu0 %951
          %953 = vrot.lane.b32.xlu0 %v935, 96
          %v954 = vpop.permute.xlu0 %953
          %955 = vrot.lane.b32.xlu0 %v936, 96
          %v956 = vpop.permute.xlu0 %955
          %957 = vrot.lane.b32.xlu0 %v937, 96
          %v958 = vpop.permute.xlu0 %957
          %959 = vrot.lane.b32.xlu0 %v938, 96
          %v960 = vpop.permute.xlu0 %959
          %961 = vrot.lane.b32.xlu0 %v939, 96
          %v962 = vpop.permute.xlu0 %961
          %963 = vrot.lane.b32.xlu0 %v940, 96
          %v964 = vpop.permute.xlu0 %963
          %v973 = vsel %vm384, %v950, 0.0
          %974 = vadd.xlane.f32.xlu0 %v973
          %v975 = vpop.xlane.xlu0 %974
          %v976 = vsel %vm384, %v952, 0.0
          %977 = vadd.xlane.f32.xlu0 %v976
          %v978 = vpop.xlane.xlu0 %977
          %v979 = vsel %vm384, %v954, 0.0
          %980 = vadd.xlane.f32.xlu0 %v979
          %v981 = vpop.xlane.xlu0 %980
          %v982 = vsel %vm384, %v956, 0.0
          %983 = vadd.xlane.f32.xlu0 %v982
          %v984 = vpop.xlane.xlu0 %983
          %v985 = vsel %vm384, %v958, 0.0
          %986 = vadd.xlane.f32.xlu0 %v985
          %v987 = vpop.xlane.xlu0 %986
          %v988 = vsel %vm384, %v960, 0.0
          %989 = vadd.xlane.f32.xlu0 %v988
          %v990 = vpop.xlane.xlu0 %989
          %v991 = vsel %vm384, %v962, 0.0
          %992 = vadd.xlane.f32.xlu0 %v991
          %v993 = vpop.xlane.xlu0 %992
          %v994 = vsel %vm384, %v964, 0.0
          %995 = vadd.xlane.f32.xlu0 %v994
          %v996 = vpop.xlane.xlu0 %995
          %v997 = vmul.f32 %v975, %v415
          %v998 = vmul.f32 %v978, %v415
          %v999 = vmul.f32 %v981, %v415
          %v1000 = vmul.f32 %v984, %v415
          %v1001 = vmul.f32 %v987, %v415
          %v1002 = vmul.f32 %v990, %v415
          %v1003 = vmul.f32 %v993, %v415
          %v1004 = vmul.f32 %v996, %v415
          %v1005 = vadd.f32 %v997, 1e-05
          %v1006 = vadd.f32 %v998, 1e-05
          %v1007 = vadd.f32 %v999, 1e-05
          %v1008 = vadd.f32 %v1000, 1e-05
          %v1009 = vadd.f32 %v1001, 1e-05
          %v1010 = vadd.f32 %v1002, 1e-05
          %v1011 = vadd.f32 %v1003, 1e-05
          %v1012 = vadd.f32 %v1004, 1e-05
          %v1013 = vrsqrt.pop %v1005
          %v1014 = vmul.f32 %v1013, %v1005
          %v1015 = vmul.f32 %v1014, %v1013
          %v1016 = vmul.f32 0.5, %v1015
          %v1017 = vsub.f32 1.5, %v1016
          %v1018 = vmul.f32 %v1013, %v1017
          %vm1019 = vweird.f32 %v1005
          %vm1020 = vweird.f32 %v1013
          %vm1021 = vmor %vm1019, %vm1020
          %v1022 = vsel %vm1021, %v1013, %v1018
          %v1023 = vrsqrt.pop %v1006
          %v1024 = vmul.f32 %v1023, %v1006
          %v1025 = vmul.f32 %v1024, %v1023
          %v1026 = vmul.f32 0.5, %v1025
          %v1027 = vsub.f32 1.5, %v1026
          %v1028 = vmul.f32 %v1023, %v1027
          %vm1029 = vweird.f32 %v1006
          %vm1030 = vweird.f32 %v1023
          %vm1031 = vmor %vm1029, %vm1030
          %v1032 = vsel %vm1031, %v1023, %v1028
          %v1033 = vrsqrt.pop %v1007
          %v1034 = vmul.f32 %v1033, %v1007
          %v1035 = vmul.f32 %v1034, %v1033
          %v1036 = vmul.f32 0.5, %v1035
          %v1037 = vsub.f32 1.5, %v1036
          %v1038 = vmul.f32 %v1033, %v1037
          %vm1039 = vweird.f32 %v1007
          %vm1040 = vweird.f32 %v1033
          %vm1041 = vmor %vm1039, %vm1040
          %v1042 = vsel %vm1041, %v1033, %v1038
          %v1043 = vrsqrt.pop %v1008
          %v1044 = vmul.f32 %v1043, %v1008
          %v1045 = vmul.f32 %v1044, %v1043
          %v1046 = vmul.f32 0.5, %v1045
          %v1047 = vsub.f32 1.5, %v1046
          %v1048 = vmul.f32 %v1043, %v1047
          %vm1049 = vweird.f32 %v1008
          %vm1050 = vweird.f32 %v1043
          %vm1051 = vmor %vm1049, %vm1050
          %v1052 = vsel %vm1051, %v1043, %v1048
          %v1053 = vrsqrt.pop %v1009
          %v1054 = vmul.f32 %v1053, %v1009
          %v1055 = vmul.f32 %v1054, %v1053
          %v1056 = vmul.f32 0.5, %v1055
          %v1057 = vsub.f32 1.5, %v1056
          %v1058 = vmul.f32 %v1053, %v1057
          %vm1059 = vweird.f32 %v1009
          %vm1060 = vweird.f32 %v1053
          %vm1061 = vmor %vm1059, %vm1060
          %v1062 = vsel %vm1061, %v1053, %v1058
          %v1063 = vrsqrt.pop %v1010
          %v1064 = vmul.f32 %v1063, %v1010
          %v1065 = vmul.f32 %v1064, %v1063
          %v1066 = vmul.f32 0.5, %v1065
          %v1067 = vsub.f32 1.5, %v1066
          %v1068 = vmul.f32 %v1063, %v1067
          %vm1069 = vweird.f32 %v1010
          %vm1070 = vweird.f32 %v1063
          %vm1071 = vmor %vm1069, %vm1070
          %v1072 = vsel %vm1071, %v1063, %v1068
          %v1073 = vrsqrt.pop %v1011
          %v1074 = vmul.f32 %v1073, %v1011
          %v1075 = vmul.f32 %v1074, %v1073
          %v1076 = vmul.f32 0.5, %v1075
          %v1077 = vsub.f32 1.5, %v1076
          %v1078 = vmul.f32 %v1073, %v1077
          %vm1079 = vweird.f32 %v1011
          %vm1080 = vweird.f32 %v1073
          %vm1081 = vmor %vm1079, %vm1080
          %v1082 = vsel %vm1081, %v1073, %v1078
          %v1083 = vrsqrt.pop %v1012
          %v1084 = vmul.f32 %v1083, %v1012
          %v1085 = vmul.f32 %v1084, %v1083
          %v1086 = vmul.f32 0.5, %v1085
          %v1087 = vsub.f32 1.5, %v1086
          %v1088 = vmul.f32 %v1083, %v1087
          %vm1089 = vweird.f32 %v1012
          %vm1090 = vweird.f32 %v1083
          %vm1091 = vmor %vm1089, %vm1090
          %v1092 = vsel %vm1091, %v1083, %v1088
          %v1093 = vmul.f32 %v925, %v1022
          %v1094 = vmul.f32 %v926, %v1032
          %v1095 = vmul.f32 %v927, %v1042
          %v1096 = vmul.f32 %v928, %v1052
          %v1097 = vmul.f32 %v929, %v1062
          %v1098 = vmul.f32 %v930, %v1072
          %v1099 = vmul.f32 %v931, %v1082
          %v1100 = vmul.f32 %v932, %v1092
          %1101 = vrot.lane.b32.xlu0 %v569, 32
          %v1102 = vpop.permute.xlu0 %1101
          %v1104 = vmul.f32 %v1093, %v1102
          %v1105 = vmul.f32 %v1094, %v1102
          %v1106 = vmul.f32 %v1095, %v1102
          %v1107 = vmul.f32 %v1096, %v1102
          %v1108 = vmul.f32 %v1097, %v1102
          %v1109 = vmul.f32 %v1098, %v1102
          %v1110 = vmul.f32 %v1099, %v1102
          %v1111 = vmul.f32 %v1100, %v1102
          %1112 = vrot.lane.b32.xlu0 %v580, 32
          %v1113 = vpop.permute.xlu0 %1112
          %v1115 = vadd.f32 %v1104, %v1113
          %v1116 = vadd.f32 %v1105, %v1113
          %v1117 = vadd.f32 %v1106, %v1113
          %v1118 = vadd.f32 %v1107, %v1113
          %v1119 = vadd.f32 %v1108, %v1113
          %v1120 = vadd.f32 %v1109, %v1113
          %v1121 = vadd.f32 %v1110, %v1113
          %v1122 = vadd.f32 %v1111, %v1113
          %vm1123 = vcmask 392448
          %1124 = vst.msk [vmem:[%s244] sm:$0xff] %vm1123, %v1115
          %1125 = vst.msk [vmem:[%s244 + $0x8] sm:$0xff] %vm1123, %v1116
          %1126 = vst.msk [vmem:[%s244 + $0x10] sm:$0xff] %vm1123, %v1117
          %1127 = vst.msk [vmem:[%s244 + $0x18] sm:$0xff] %vm1123, %v1118
          %1128 = vst.msk [vmem:[%s244 + $0x20] sm:$0xff] %vm1123, %v1119
          %1129 = vst.msk [vmem:[%s244 + $0x28] sm:$0xff] %vm1123, %v1120
          %1130 = vst.msk [vmem:[%s244 + $0x30] sm:$0xff] %vm1123, %v1121
          %1131 = vst.msk [vmem:[%s244 + $0x38] sm:$0xff] %vm1123, %v1122
          %1132 = vrot.lane.b32.xlu0 %v374, 80
          %v1133 = vpop.permute.xlu0 %1132
          %1134 = vrot.lane.b32.xlu0 %v375, 80
          %v1135 = vpop.permute.xlu0 %1134
          %1136 = vrot.lane.b32.xlu0 %v376, 80
          %v1137 = vpop.permute.xlu0 %1136
          %1138 = vrot.lane.b32.xlu0 %v377, 80
          %v1139 = vpop.permute.xlu0 %1138
          %1140 = vrot.lane.b32.xlu0 %v378, 80
          %v1141 = vpop.permute.xlu0 %1140
          %1142 = vrot.lane.b32.xlu0 %v379, 80
          %v1143 = vpop.permute.xlu0 %1142
          %1144 = vrot.lane.b32.xlu0 %v380, 80
          %v1145 = vpop.permute.xlu0 %1144
          %1146 = vrot.lane.b32.xlu0 %v381, 80
          %v1147 = vpop.permute.xlu0 %1146
          %v1156 = vsel %vm384, %v1133, 0.0
          %1157 = vadd.xlane.f32.xlu0 %v1156
          %v1158 = vpop.xlane.xlu0 %1157
          %v1159 = vsel %vm384, %v1135, 0.0
          %1160 = vadd.xlane.f32.xlu0 %v1159
          %v1161 = vpop.xlane.xlu0 %1160
          %v1162 = vsel %vm384, %v1137, 0.0
          %1163 = vadd.xlane.f32.xlu0 %v1162
          %v1164 = vpop.xlane.xlu0 %1163
          %v1165 = vsel %vm384, %v1139, 0.0
          %1166 = vadd.xlane.f32.xlu0 %v1165
          %v1167 = vpop.xlane.xlu0 %1166
          %v1168 = vsel %vm384, %v1141, 0.0
          %1169 = vadd.xlane.f32.xlu0 %v1168
          %v1170 = vpop.xlane.xlu0 %1169
          %v1171 = vsel %vm384, %v1143, 0.0
          %1172 = vadd.xlane.f32.xlu0 %v1171
          %v1173 = vpop.xlane.xlu0 %1172
          %v1174 = vsel %vm384, %v1145, 0.0
          %1175 = vadd.xlane.f32.xlu0 %v1174
          %v1176 = vpop.xlane.xlu0 %1175
          %v1177 = vsel %vm384, %v1147, 0.0
          %1178 = vadd.xlane.f32.xlu0 %v1177
          %v1179 = vpop.xlane.xlu0 %1178
          %v1180 = vmul.f32 %v1158, %v415
          %v1181 = vmul.f32 %v1161, %v415
          %v1182 = vmul.f32 %v1164, %v415
          %v1183 = vmul.f32 %v1167, %v415
          %v1184 = vmul.f32 %v1170, %v415
          %v1185 = vmul.f32 %v1173, %v415
          %v1186 = vmul.f32 %v1176, %v415
          %v1187 = vmul.f32 %v1179, %v415
          %v1188 = vsub.f32 %v374, %v1180
          %v1189 = vsub.f32 %v375, %v1181
          %v1190 = vsub.f32 %v376, %v1182
          %v1191 = vsub.f32 %v377, %v1183
          %v1192 = vsub.f32 %v378, %v1184
          %v1193 = vsub.f32 %v379, %v1185
          %v1194 = vsub.f32 %v380, %v1186
          %v1195 = vsub.f32 %v381, %v1187
          %v1196 = vmul.f32 %v1188, %v1188
          %v1197 = vmul.f32 %v1189, %v1189
          %v1198 = vmul.f32 %v1190, %v1190
          %v1199 = vmul.f32 %v1191, %v1191
          %v1200 = vmul.f32 %v1192, %v1192
          %v1201 = vmul.f32 %v1193, %v1193
          %v1202 = vmul.f32 %v1194, %v1194
          %v1203 = vmul.f32 %v1195, %v1195
          %1212 = vrot.lane.b32.xlu0 %v1196, 80
          %v1213 = vpop.permute.xlu0 %1212
          %1214 = vrot.lane.b32.xlu0 %v1197, 80
          %v1215 = vpop.permute.xlu0 %1214
          %1216 = vrot.lane.b32.xlu0 %v1198, 80
          %v1217 = vpop.permute.xlu0 %1216
          %1218 = vrot.lane.b32.xlu0 %v1199, 80
          %v1219 = vpop.permute.xlu0 %1218
          %1220 = vrot.lane.b32.xlu0 %v1200, 80
          %v1221 = vpop.permute.xlu0 %1220
          %1222 = vrot.lane.b32.xlu0 %v1201, 80
          %v1223 = vpop.permute.xlu0 %1222
          %1224 = vrot.lane.b32.xlu0 %v1202, 80
          %v1225 = vpop.permute.xlu0 %1224
          %1226 = vrot.lane.b32.xlu0 %v1203, 80
          %v1227 = vpop.permute.xlu0 %1226
          %v1236 = vsel %vm384, %v1213, 0.0
          %1237 = vadd.xlane.f32.xlu0 %v1236
          %v1238 = vpop.xlane.xlu0 %1237
          %v1239 = vsel %vm384, %v1215, 0.0
          %1240 = vadd.xlane.f32.xlu0 %v1239
          %v1241 = vpop.xlane.xlu0 %1240
          %v1242 = vsel %vm384, %v1217, 0.0
          %1243 = vadd.xlane.f32.xlu0 %v1242
          %v1244 = vpop.xlane.xlu0 %1243
          %v1245 = vsel %vm384, %v1219, 0.0
          %1246 = vadd.xlane.f32.xlu0 %v1245
          %v1247 = vpop.xlane.xlu0 %1246
          %v1248 = vsel %vm384, %v1221, 0.0
          %1249 = vadd.xlane.f32.xlu0 %v1248
          %v1250 = vpop.xlane.xlu0 %1249
          %v1251 = vsel %vm384, %v1223, 0.0
          %1252 = vadd.xlane.f32.xlu0 %v1251
          %v1253 = vpop.xlane.xlu0 %1252
          %v1254 = vsel %vm384, %v1225, 0.0
          %1255 = vadd.xlane.f32.xlu0 %v1254
          %v1256 = vpop.xlane.xlu0 %1255
          %v1257 = vsel %vm384, %v1227, 0.0
          %1258 = vadd.xlane.f32.xlu0 %v1257
          %v1259 = vpop.xlane.xlu0 %1258
          %v1260 = vmul.f32 %v1238, %v415
          %v1261 = vmul.f32 %v1241, %v415
          %v1262 = vmul.f32 %v1244, %v415
          %v1263 = vmul.f32 %v1247, %v415
          %v1264 = vmul.f32 %v1250, %v415
          %v1265 = vmul.f32 %v1253, %v415
          %v1266 = vmul.f32 %v1256, %v415
          %v1267 = vmul.f32 %v1259, %v415
          %v1268 = vadd.f32 %v1260, 1e-05
          %v1269 = vadd.f32 %v1261, 1e-05
          %v1270 = vadd.f32 %v1262, 1e-05
          %v1271 = vadd.f32 %v1263, 1e-05
          %v1272 = vadd.f32 %v1264, 1e-05
          %v1273 = vadd.f32 %v1265, 1e-05
          %v1274 = vadd.f32 %v1266, 1e-05
          %v1275 = vadd.f32 %v1267, 1e-05
          %v1276 = vrsqrt.pop %v1268
          %v1277 = vmul.f32 %v1276, %v1268
          %v1278 = vmul.f32 %v1277, %v1276
          %v1279 = vmul.f32 0.5, %v1278
          %v1280 = vsub.f32 1.5, %v1279
          %v1281 = vmul.f32 %v1276, %v1280
          %vm1282 = vweird.f32 %v1268
          %vm1283 = vweird.f32 %v1276
          %vm1284 = vmor %vm1282, %vm1283
          %v1285 = vsel %vm1284, %v1276, %v1281
          %v1286 = vrsqrt.pop %v1269
          %v1287 = vmul.f32 %v1286, %v1269
          %v1288 = vmul.f32 %v1287, %v1286
          %v1289 = vmul.f32 0.5, %v1288
          %v1290 = vsub.f32 1.5, %v1289
          %v1291 = vmul.f32 %v1286, %v1290
          %vm1292 = vweird.f32 %v1269
          %vm1293 = vweird.f32 %v1286
          %vm1294 = vmor %vm1292, %vm1293
          %v1295 = vsel %vm1294, %v1286, %v1291
          %v1296 = vrsqrt.pop %v1270
          %v1297 = vmul.f32 %v1296, %v1270
          %v1298 = vmul.f32 %v1297, %v1296
          %v1299 = vmul.f32 0.5, %v1298
          %v1300 = vsub.f32 1.5, %v1299
          %v1301 = vmul.f32 %v1296, %v1300
          %vm1302 = vweird.f32 %v1270
          %vm1303 = vweird.f32 %v1296
          %vm1304 = vmor %vm1302, %vm1303
          %v1305 = vsel %vm1304, %v1296, %v1301
          %v1306 = vrsqrt.pop %v1271
          %v1307 = vmul.f32 %v1306, %v1271
          %v1308 = vmul.f32 %v1307, %v1306
          %v1309 = vmul.f32 0.5, %v1308
          %v1310 = vsub.f32 1.5, %v1309
          %v1311 = vmul.f32 %v1306, %v1310
          %vm1312 = vweird.f32 %v1271
          %vm1313 = vweird.f32 %v1306
          %vm1314 = vmor %vm1312, %vm1313
          %v1315 = vsel %vm1314, %v1306, %v1311
          %v1316 = vrsqrt.pop %v1272
          %v1317 = vmul.f32 %v1316, %v1272
          %v1318 = vmul.f32 %v1317, %v1316
          %v1319 = vmul.f32 0.5, %v1318
          %v1320 = vsub.f32 1.5, %v1319
          %v1321 = vmul.f32 %v1316, %v1320
          %vm1322 = vweird.f32 %v1272
          %vm1323 = vweird.f32 %v1316
          %vm1324 = vmor %vm1322, %vm1323
          %v1325 = vsel %vm1324, %v1316, %v1321
          %v1326 = vrsqrt.pop %v1273
          %v1327 = vmul.f32 %v1326, %v1273
          %v1328 = vmul.f32 %v1327, %v1326
          %v1329 = vmul.f32 0.5, %v1328
          %v1330 = vsub.f32 1.5, %v1329
          %v1331 = vmul.f32 %v1326, %v1330
          %vm1332 = vweird.f32 %v1273
          %vm1333 = vweird.f32 %v1326
          %vm1334 = vmor %vm1332, %vm1333
          %v1335 = vsel %vm1334, %v1326, %v1331
          %v1336 = vrsqrt.pop %v1274
          %v1337 = vmul.f32 %v1336, %v1274
          %v1338 = vmul.f32 %v1337, %v1336
          %v1339 = vmul.f32 0.5, %v1338
          %v1340 = vsub.f32 1.5, %v1339
          %v1341 = vmul.f32 %v1336, %v1340
          %vm1342 = vweird.f32 %v1274
          %vm1343 = vweird.f32 %v1336
          %vm1344 = vmor %vm1342, %vm1343
          %v1345 = vsel %vm1344, %v1336, %v1341
          %v1346 = vrsqrt.pop %v1275
          %v1347 = vmul.f32 %v1346, %v1275
          %v1348 = vmul.f32 %v1347, %v1346
          %v1349 = vmul.f32 0.5, %v1348
          %v1350 = vsub.f32 1.5, %v1349
          %v1351 = vmul.f32 %v1346, %v1350
          %vm1352 = vweird.f32 %v1275
          %vm1353 = vweird.f32 %v1346
          %vm1354 = vmor %vm1352, %vm1353
          %v1355 = vsel %vm1354, %v1346, %v1351
          %v1356 = vmul.f32 %v1188, %v1285
          %v1357 = vmul.f32 %v1189, %v1295
          %v1358 = vmul.f32 %v1190, %v1305
          %v1359 = vmul.f32 %v1191, %v1315
          %v1360 = vmul.f32 %v1192, %v1325
          %v1361 = vmul.f32 %v1193, %v1335
          %v1362 = vmul.f32 %v1194, %v1345
          %v1363 = vmul.f32 %v1195, %v1355
          %1364 = vrot.lane.b32.xlu0 %v569, 48
          %v1365 = vpop.permute.xlu0 %1364
          %v1367 = vmul.f32 %v1356, %v1365
          %v1368 = vmul.f32 %v1357, %v1365
          %v1369 = vmul.f32 %v1358, %v1365
          %v1370 = vmul.f32 %v1359, %v1365
          %v1371 = vmul.f32 %v1360, %v1365
          %v1372 = vmul.f32 %v1361, %v1365
          %v1373 = vmul.f32 %v1362, %v1365
          %v1374 = vmul.f32 %v1363, %v1365
          %1375 = vrot.lane.b32.xlu0 %v580, 48
          %v1376 = vpop.permute.xlu0 %1375
          %v1378 = vadd.f32 %v1367, %v1376
          %v1379 = vadd.f32 %v1368, %v1376
          %v1380 = vadd.f32 %v1369, %v1376
          %v1381 = vadd.f32 %v1370, %v1376
          %v1382 = vadd.f32 %v1371, %v1376
          %v1383 = vadd.f32 %v1372, %v1376
          %v1384 = vadd.f32 %v1373, %v1376
          %v1385 = vadd.f32 %v1374, %v1376
          %vm1386 = vcmask 523648
          %1387 = vst.msk [vmem:[%s244] sm:$0xff] %vm1386, %v1378
          %1388 = vst.msk [vmem:[%s244 + $0x8] sm:$0xff] %vm1386, %v1379
          %1389 = vst.msk [vmem:[%s244 + $0x10] sm:$0xff] %vm1386, %v1380
          %1390 = vst.msk [vmem:[%s244 + $0x18] sm:$0xff] %vm1386, %v1381
          %1391 = vst.msk [vmem:[%s244 + $0x20] sm:$0xff] %vm1386, %v1382
          %1392 = vst.msk [vmem:[%s244 + $0x28] sm:$0xff] %vm1386, %v1383
          %1393 = vst.msk [vmem:[%s244 + $0x30] sm:$0xff] %vm1386, %v1384
          %1394 = vst.msk [vmem:[%s244 + $0x38] sm:$0xff] %vm1386, %v1385
          %1395 = vrot.lane.b32.xlu0 %v374, 64
          %v1396 = vpop.permute.xlu0 %1395
          %1397 = vrot.lane.b32.xlu0 %v375, 64
          %v1398 = vpop.permute.xlu0 %1397
          %1399 = vrot.lane.b32.xlu0 %v376, 64
          %v1400 = vpop.permute.xlu0 %1399
          %1401 = vrot.lane.b32.xlu0 %v377, 64
          %v1402 = vpop.permute.xlu0 %1401
          %1403 = vrot.lane.b32.xlu0 %v378, 64
          %v1404 = vpop.permute.xlu0 %1403
          %1405 = vrot.lane.b32.xlu0 %v379, 64
          %v1406 = vpop.permute.xlu0 %1405
          %1407 = vrot.lane.b32.xlu0 %v380, 64
          %v1408 = vpop.permute.xlu0 %1407
          %1409 = vrot.lane.b32.xlu0 %v381, 64
          %v1410 = vpop.permute.xlu0 %1409
          %v1419 = vsel %vm384, %v1396, 0.0
          %1420 = vadd.xlane.f32.xlu0 %v1419
          %v1421 = vpop.xlane.xlu0 %1420
          %v1422 = vsel %vm384, %v1398, 0.0
          %1423 = vadd.xlane.f32.xlu0 %v1422
          %v1424 = vpop.xlane.xlu0 %1423
          %v1425 = vsel %vm384, %v1400, 0.0
          %1426 = vadd.xlane.f32.xlu0 %v1425
          %v1427 = vpop.xlane.xlu0 %1426
          %v1428 = vsel %vm384, %v1402, 0.0
          %1429 = vadd.xlane.f32.xlu0 %v1428
          %v1430 = vpop.xlane.xlu0 %1429
          %v1431 = vsel %vm384, %v1404, 0.0
          %1432 = vadd.xlane.f32.xlu0 %v1431
          %v1433 = vpop.xlane.xlu0 %1432
          %v1434 = vsel %vm384, %v1406, 0.0
          %1435 = vadd.xlane.f32.xlu0 %v1434
          %v1436 = vpop.xlane.xlu0 %1435
          %v1437 = vsel %vm384, %v1408, 0.0
          %1438 = vadd.xlane.f32.xlu0 %v1437
          %v1439 = vpop.xlane.xlu0 %1438
          %v1440 = vsel %vm384, %v1410, 0.0
          %1441 = vadd.xlane.f32.xlu0 %v1440
          %v1442 = vpop.xlane.xlu0 %1441
          %v1443 = vmul.f32 %v1421, %v415
          %v1444 = vmul.f32 %v1424, %v415
          %v1445 = vmul.f32 %v1427, %v415
          %v1446 = vmul.f32 %v1430, %v415
          %v1447 = vmul.f32 %v1433, %v415
          %v1448 = vmul.f32 %v1436, %v415
          %v1449 = vmul.f32 %v1439, %v415
          %v1450 = vmul.f32 %v1442, %v415
          %v1451 = vsub.f32 %v374, %v1443
          %v1452 = vsub.f32 %v375, %v1444
          %v1453 = vsub.f32 %v376, %v1445
          %v1454 = vsub.f32 %v377, %v1446
          %v1455 = vsub.f32 %v378, %v1447
          %v1456 = vsub.f32 %v379, %v1448
          %v1457 = vsub.f32 %v380, %v1449
          %v1458 = vsub.f32 %v381, %v1450
          %v1459 = vmul.f32 %v1451, %v1451
          %v1460 = vmul.f32 %v1452, %v1452
          %v1461 = vmul.f32 %v1453, %v1453
          %v1462 = vmul.f32 %v1454, %v1454
          %v1463 = vmul.f32 %v1455, %v1455
          %v1464 = vmul.f32 %v1456, %v1456
          %v1465 = vmul.f32 %v1457, %v1457
          %v1466 = vmul.f32 %v1458, %v1458
          %1475 = vrot.lane.b32.xlu0 %v1459, 64
          %v1476 = vpop.permute.xlu0 %1475
          %1477 = vrot.lane.b32.xlu0 %v1460, 64
          %v1478 = vpop.permute.xlu0 %1477
          %1479 = vrot.lane.b32.xlu0 %v1461, 64
          %v1480 = vpop.permute.xlu0 %1479
          %1481 = vrot.lane.b32.xlu0 %v1462, 64
          %v1482 = vpop.permute.xlu0 %1481
          %1483 = vrot.lane.b32.xlu0 %v1463, 64
          %v1484 = vpop.permute.xlu0 %1483
          %1485 = vrot.lane.b32.xlu0 %v1464, 64
          %v1486 = vpop.permute.xlu0 %1485
          %1487 = vrot.lane.b32.xlu0 %v1465, 64
          %v1488 = vpop.permute.xlu0 %1487
          %1489 = vrot.lane.b32.xlu0 %v1466, 64
          %v1490 = vpop.permute.xlu0 %1489
          %v1499 = vsel %vm384, %v1476, 0.0
          %1500 = vadd.xlane.f32.xlu0 %v1499
          %v1501 = vpop.xlane.xlu0 %1500
          %v1502 = vsel %vm384, %v1478, 0.0
          %1503 = vadd.xlane.f32.xlu0 %v1502
          %v1504 = vpop.xlane.xlu0 %1503
          %v1505 = vsel %vm384, %v1480, 0.0
          %1506 = vadd.xlane.f32.xlu0 %v1505
          %v1507 = vpop.xlane.xlu0 %1506
          %v1508 = vsel %vm384, %v1482, 0.0
          %1509 = vadd.xlane.f32.xlu0 %v1508
          %v1510 = vpop.xlane.xlu0 %1509
          %v1511 = vsel %vm384, %v1484, 0.0
          %1512 = vadd.xlane.f32.xlu0 %v1511
          %v1513 = vpop.xlane.xlu0 %1512
          %v1514 = vsel %vm384, %v1486, 0.0
          %1515 = vadd.xlane.f32.xlu0 %v1514
          %v1516 = vpop.xlane.xlu0 %1515
          %v1517 = vsel %vm384, %v1488, 0.0
          %1518 = vadd.xlane.f32.xlu0 %v1517
          %v1519 = vpop.xlane.xlu0 %1518
          %v1520 = vsel %vm384, %v1490, 0.0
          %1521 = vadd.xlane.f32.xlu0 %v1520
          %v1522 = vpop.xlane.xlu0 %1521
          %v1523 = vmul.f32 %v1501, %v415
          %v1524 = vmul.f32 %v1504, %v415
          %v1525 = vmul.f32 %v1507, %v415
          %v1526 = vmul.f32 %v1510, %v415
          %v1527 = vmul.f32 %v1513, %v415
          %v1528 = vmul.f32 %v1516, %v415
          %v1529 = vmul.f32 %v1519, %v415
          %v1530 = vmul.f32 %v1522, %v415
          %v1531 = vadd.f32 %v1523, 1e-05
          %v1532 = vadd.f32 %v1524, 1e-05
          %v1533 = vadd.f32 %v1525, 1e-05
          %v1534 = vadd.f32 %v1526, 1e-05
          %v1535 = vadd.f32 %v1527, 1e-05
          %v1536 = vadd.f32 %v1528, 1e-05
          %v1537 = vadd.f32 %v1529, 1e-05
          %v1538 = vadd.f32 %v1530, 1e-05
          %v1539 = vrsqrt.pop %v1531
          %v1540 = vmul.f32 %v1539, %v1531
          %v1541 = vmul.f32 %v1540, %v1539
          %v1542 = vmul.f32 0.5, %v1541
          %v1543 = vsub.f32 1.5, %v1542
          %v1544 = vmul.f32 %v1539, %v1543
          %vm1545 = vweird.f32 %v1531
          %vm1546 = vweird.f32 %v1539
          %vm1547 = vmor %vm1545, %vm1546
          %v1548 = vsel %vm1547, %v1539, %v1544
          %v1549 = vrsqrt.pop %v1532
          %v1550 = vmul.f32 %v1549, %v1532
          %v1551 = vmul.f32 %v1550, %v1549
          %v1552 = vmul.f32 0.5, %v1551
          %v1553 = vsub.f32 1.5, %v1552
          %v1554 = vmul.f32 %v1549, %v1553
          %vm1555 = vweird.f32 %v1532
          %vm1556 = vweird.f32 %v1549
          %vm1557 = vmor %vm1555, %vm1556
          %v1558 = vsel %vm1557, %v1549, %v1554
          %v1559 = vrsqrt.pop %v1533
          %v1560 = vmul.f32 %v1559, %v1533
          %v1561 = vmul.f32 %v1560, %v1559
          %v1562 = vmul.f32 0.5, %v1561
          %v1563 = vsub.f32 1.5, %v1562
          %v1564 = vmul.f32 %v1559, %v1563
          %vm1565 = vweird.f32 %v1533
          %vm1566 = vweird.f32 %v1559
          %vm1567 = vmor %vm1565, %vm1566
          %v1568 = vsel %vm1567, %v1559, %v1564
          %v1569 = vrsqrt.pop %v1534
          %v1570 = vmul.f32 %v1569, %v1534
          %v1571 = vmul.f32 %v1570, %v1569
          %v1572 = vmul.f32 0.5, %v1571
          %v1573 = vsub.f32 1.5, %v1572
          %v1574 = vmul.f32 %v1569, %v1573
          %vm1575 = vweird.f32 %v1534
          %vm1576 = vweird.f32 %v1569
          %vm1577 = vmor %vm1575, %vm1576
          %v1578 = vsel %vm1577, %v1569, %v1574
          %v1579 = vrsqrt.pop %v1535
          %v1580 = vmul.f32 %v1579, %v1535
          %v1581 = vmul.f32 %v1580, %v1579
          %v1582 = vmul.f32 0.5, %v1581
          %v1583 = vsub.f32 1.5, %v1582
          %v1584 = vmul.f32 %v1579, %v1583
          %vm1585 = vweird.f32 %v1535
          %vm1586 = vweird.f32 %v1579
          %vm1587 = vmor %vm1585, %vm1586
          %v1588 = vsel %vm1587, %v1579, %v1584
          %v1589 = vrsqrt.pop %v1536
          %v1590 = vmul.f32 %v1589, %v1536
          %v1591 = vmul.f32 %v1590, %v1589
          %v1592 = vmul.f32 0.5, %v1591
          %v1593 = vsub.f32 1.5, %v1592
          %v1594 = vmul.f32 %v1589, %v1593
          %vm1595 = vweird.f32 %v1536
          %vm1596 = vweird.f32 %v1589
          %vm1597 = vmor %vm1595, %vm1596
          %v1598 = vsel %vm1597, %v1589, %v1594
          %v1599 = vrsqrt.pop %v1537
          %v1600 = vmul.f32 %v1599, %v1537
          %v1601 = vmul.f32 %v1600, %v1599
          %v1602 = vmul.f32 0.5, %v1601
          %v1603 = vsub.f32 1.5, %v1602
          %v1604 = vmul.f32 %v1599, %v1603
          %vm1605 = vweird.f32 %v1537
          %vm1606 = vweird.f32 %v1599
          %vm1607 = vmor %vm1605, %vm1606
          %v1608 = vsel %vm1607, %v1599, %v1604
          %v1609 = vrsqrt.pop %v1538
          %v1610 = vmul.f32 %v1609, %v1538
          %v1611 = vmul.f32 %v1610, %v1609
          %v1612 = vmul.f32 0.5, %v1611
          %v1613 = vsub.f32 1.5, %v1612
          %v1614 = vmul.f32 %v1609, %v1613
          %vm1615 = vweird.f32 %v1538
          %vm1616 = vweird.f32 %v1609
          %vm1617 = vmor %vm1615, %vm1616
          %v1618 = vsel %vm1617, %v1609, %v1614
          %v1619 = vmul.f32 %v1451, %v1548
          %v1620 = vmul.f32 %v1452, %v1558
          %v1621 = vmul.f32 %v1453, %v1568
          %v1622 = vmul.f32 %v1454, %v1578
          %v1623 = vmul.f32 %v1455, %v1588
          %v1624 = vmul.f32 %v1456, %v1598
          %v1625 = vmul.f32 %v1457, %v1608
          %v1626 = vmul.f32 %v1458, %v1618
          %1627 = vrot.lane.b32.xlu0 %v569, 64
          %v1628 = vpop.permute.xlu0 %1627
          %v1630 = vmul.f32 %v1619, %v1628
          %v1631 = vmul.f32 %v1620, %v1628
          %v1632 = vmul.f32 %v1621, %v1628
          %v1633 = vmul.f32 %v1622, %v1628
          %v1634 = vmul.f32 %v1623, %v1628
          %v1635 = vmul.f32 %v1624, %v1628
          %v1636 = vmul.f32 %v1625, %v1628
          %v1637 = vmul.f32 %v1626, %v1628
          %1638 = vrot.lane.b32.xlu0 %v580, 64
          %v1639 = vpop.permute.xlu0 %1638
          %v1641 = vadd.f32 %v1630, %v1639
          %v1642 = vadd.f32 %v1631, %v1639
          %v1643 = vadd.f32 %v1632, %v1639
          %v1644 = vadd.f32 %v1633, %v1639
          %v1645 = vadd.f32 %v1634, %v1639
          %v1646 = vadd.f32 %v1635, %v1639
          %v1647 = vadd.f32 %v1636, %v1639
          %v1648 = vadd.f32 %v1637, %v1639
          %vm1649 = vcmask 654848
          %1650 = vst.msk [vmem:[%s244] sm:$0xff] %vm1649, %v1641
          %1651 = vst.msk [vmem:[%s244 + $0x8] sm:$0xff] %vm1649, %v1642
          %1652 = vst.msk [vmem:[%s244 + $0x10] sm:$0xff] %vm1649, %v1643
          %1653 = vst.msk [vmem:[%s244 + $0x18] sm:$0xff] %vm1649, %v1644
          %1654 = vst.msk [vmem:[%s244 + $0x20] sm:$0xff] %vm1649, %v1645
          %1655 = vst.msk [vmem:[%s244 + $0x28] sm:$0xff] %vm1649, %v1646
          %1656 = vst.msk [vmem:[%s244 + $0x30] sm:$0xff] %vm1649, %v1647
          %1657 = vst.msk [vmem:[%s244 + $0x38] sm:$0xff] %vm1649, %v1648
          %1658 = vrot.lane.b32.xlu0 %v374, 48
          %v1659 = vpop.permute.xlu0 %1658
          %1660 = vrot.lane.b32.xlu0 %v375, 48
          %v1661 = vpop.permute.xlu0 %1660
          %1662 = vrot.lane.b32.xlu0 %v376, 48
          %v1663 = vpop.permute.xlu0 %1662
          %1664 = vrot.lane.b32.xlu0 %v377, 48
          %v1665 = vpop.permute.xlu0 %1664
          %1666 = vrot.lane.b32.xlu0 %v378, 48
          %v1667 = vpop.permute.xlu0 %1666
          %1668 = vrot.lane.b32.xlu0 %v379, 48
          %v1669 = vpop.permute.xlu0 %1668
          %1670 = vrot.lane.b32.xlu0 %v380, 48
          %v1671 = vpop.permute.xlu0 %1670
          %1672 = vrot.lane.b32.xlu0 %v381, 48
          %v1673 = vpop.permute.xlu0 %1672
          %v1682 = vsel %vm384, %v1659, 0.0
          %1683 = vadd.xlane.f32.xlu0 %v1682
          %v1684 = vpop.xlane.xlu0 %1683
          %v1685 = vsel %vm384, %v1661, 0.0
          %1686 = vadd.xlane.f32.xlu0 %v1685
          %v1687 = vpop.xlane.xlu0 %1686
          %v1688 = vsel %vm384, %v1663, 0.0
          %1689 = vadd.xlane.f32.xlu0 %v1688
          %v1690 = vpop.xlane.xlu0 %1689
          %v1691 = vsel %vm384, %v1665, 0.0
          %1692 = vadd.xlane.f32.xlu0 %v1691
          %v1693 = vpop.xlane.xlu0 %1692
          %v1694 = vsel %vm384, %v1667, 0.0
          %1695 = vadd.xlane.f32.xlu0 %v1694
          %v1696 = vpop.xlane.xlu0 %1695
          %v1697 = vsel %vm384, %v1669, 0.0
          %1698 = vadd.xlane.f32.xlu0 %v1697
          %v1699 = vpop.xlane.xlu0 %1698
          %v1700 = vsel %vm384, %v1671, 0.0
          %1701 = vadd.xlane.f32.xlu0 %v1700
          %v1702 = vpop.xlane.xlu0 %1701
          %v1703 = vsel %vm384, %v1673, 0.0
          %1704 = vadd.xlane.f32.xlu0 %v1703
          %v1705 = vpop.xlane.xlu0 %1704
          %v1706 = vmul.f32 %v1684, %v415
          %v1707 = vmul.f32 %v1687, %v415
          %v1708 = vmul.f32 %v1690, %v415
          %v1709 = vmul.f32 %v1693, %v415
          %v1710 = vmul.f32 %v1696, %v415
          %v1711 = vmul.f32 %v1699, %v415
          %v1712 = vmul.f32 %v1702, %v415
          %v1713 = vmul.f32 %v1705, %v415
          %v1714 = vsub.f32 %v374, %v1706
          %v1715 = vsub.f32 %v375, %v1707
          %v1716 = vsub.f32 %v376, %v1708
          %v1717 = vsub.f32 %v377, %v1709
          %v1718 = vsub.f32 %v378, %v1710
          %v1719 = vsub.f32 %v379, %v1711
          %v1720 = vsub.f32 %v380, %v1712
          %v1721 = vsub.f32 %v381, %v1713
          %v1722 = vmul.f32 %v1714, %v1714
          %v1723 = vmul.f32 %v1715, %v1715
          %v1724 = vmul.f32 %v1716, %v1716
          %v1725 = vmul.f32 %v1717, %v1717
          %v1726 = vmul.f32 %v1718, %v1718
          %v1727 = vmul.f32 %v1719, %v1719
          %v1728 = vmul.f32 %v1720, %v1720
          %v1729 = vmul.f32 %v1721, %v1721
          %1738 = vrot.lane.b32.xlu0 %v1722, 48
          %v1739 = vpop.permute.xlu0 %1738
          %1740 = vrot.lane.b32.xlu0 %v1723, 48
          %v1741 = vpop.permute.xlu0 %1740
          %1742 = vrot.lane.b32.xlu0 %v1724, 48
          %v1743 = vpop.permute.xlu0 %1742
          %1744 = vrot.lane.b32.xlu0 %v1725, 48
          %v1745 = vpop.permute.xlu0 %1744
          %1746 = vrot.lane.b32.xlu0 %v1726, 48
          %v1747 = vpop.permute.xlu0 %1746
          %1748 = vrot.lane.b32.xlu0 %v1727, 48
          %v1749 = vpop.permute.xlu0 %1748
          %1750 = vrot.lane.b32.xlu0 %v1728, 48
          %v1751 = vpop.permute.xlu0 %1750
          %1752 = vrot.lane.b32.xlu0 %v1729, 48
          %v1753 = vpop.permute.xlu0 %1752
          %v1762 = vsel %vm384, %v1739, 0.0
          %1763 = vadd.xlane.f32.xlu0 %v1762
          %v1764 = vpop.xlane.xlu0 %1763
          %v1765 = vsel %vm384, %v1741, 0.0
          %1766 = vadd.xlane.f32.xlu0 %v1765
          %v1767 = vpop.xlane.xlu0 %1766
          %v1768 = vsel %vm384, %v1743, 0.0
          %1769 = vadd.xlane.f32.xlu0 %v1768
          %v1770 = vpop.xlane.xlu0 %1769
          %v1771 = vsel %vm384, %v1745, 0.0
          %1772 = vadd.xlane.f32.xlu0 %v1771
          %v1773 = vpop.xlane.xlu0 %1772
          %v1774 = vsel %vm384, %v1747, 0.0
          %1775 = vadd.xlane.f32.xlu0 %v1774
          %v1776 = vpop.xlane.xlu0 %1775
          %v1777 = vsel %vm384, %v1749, 0.0
          %1778 = vadd.xlane.f32.xlu0 %v1777
          %v1779 = vpop.xlane.xlu0 %1778
          %v1780 = vsel %vm384, %v1751, 0.0
          %1781 = vadd.xlane.f32.xlu0 %v1780
          %v1782 = vpop.xlane.xlu0 %1781
          %v1783 = vsel %vm384, %v1753, 0.0
          %1784 = vadd.xlane.f32.xlu0 %v1783
          %v1785 = vpop.xlane.xlu0 %1784
          %v1786 = vmul.f32 %v1764, %v415
          %v1787 = vmul.f32 %v1767, %v415
          %v1788 = vmul.f32 %v1770, %v415
          %v1789 = vmul.f32 %v1773, %v415
          %v1790 = vmul.f32 %v1776, %v415
          %v1791 = vmul.f32 %v1779, %v415
          %v1792 = vmul.f32 %v1782, %v415
          %v1793 = vmul.f32 %v1785, %v415
          %v1794 = vadd.f32 %v1786, 1e-05
          %v1795 = vadd.f32 %v1787, 1e-05
          %v1796 = vadd.f32 %v1788, 1e-05
          %v1797 = vadd.f32 %v1789, 1e-05
          %v1798 = vadd.f32 %v1790, 1e-05
          %v1799 = vadd.f32 %v1791, 1e-05
          %v1800 = vadd.f32 %v1792, 1e-05
          %v1801 = vadd.f32 %v1793, 1e-05
          %v1802 = vrsqrt.pop %v1794
          %v1803 = vmul.f32 %v1802, %v1794
          %v1804 = vmul.f32 %v1803, %v1802
          %v1805 = vmul.f32 0.5, %v1804
          %v1806 = vsub.f32 1.5, %v1805
          %v1807 = vmul.f32 %v1802, %v1806
          %vm1808 = vweird.f32 %v1794
          %vm1809 = vweird.f32 %v1802
          %vm1810 = vmor %vm1808, %vm1809
          %v1811 = vsel %vm1810, %v1802, %v1807
          %v1812 = vrsqrt.pop %v1795
          %v1813 = vmul.f32 %v1812, %v1795
          %v1814 = vmul.f32 %v1813, %v1812
          %v1815 = vmul.f32 0.5, %v1814
          %v1816 = vsub.f32 1.5, %v1815
          %v1817 = vmul.f32 %v1812, %v1816
          %vm1818 = vweird.f32 %v1795
          %vm1819 = vweird.f32 %v1812
          %vm1820 = vmor %vm1818, %vm1819
          %v1821 = vsel %vm1820, %v1812, %v1817
          %v1822 = vrsqrt.pop %v1796
          %v1823 = vmul.f32 %v1822, %v1796
          %v1824 = vmul.f32 %v1823, %v1822
          %v1825 = vmul.f32 0.5, %v1824
          %v1826 = vsub.f32 1.5, %v1825
          %v1827 = vmul.f32 %v1822, %v1826
          %vm1828 = vweird.f32 %v1796
          %vm1829 = vweird.f32 %v1822
          %vm1830 = vmor %vm1828, %vm1829
          %v1831 = vsel %vm1830, %v1822, %v1827
          %v1832 = vrsqrt.pop %v1797
          %v1833 = vmul.f32 %v1832, %v1797
          %v1834 = vmul.f32 %v1833, %v1832
          %v1835 = vmul.f32 0.5, %v1834
          %v1836 = vsub.f32 1.5, %v1835
          %v1837 = vmul.f32 %v1832, %v1836
          %vm1838 = vweird.f32 %v1797
          %vm1839 = vweird.f32 %v1832
          %vm1840 = vmor %vm1838, %vm1839
          %v1841 = vsel %vm1840, %v1832, %v1837
          %v1842 = vrsqrt.pop %v1798
          %v1843 = vmul.f32 %v1842, %v1798
          %v1844 = vmul.f32 %v1843, %v1842
          %v1845 = vmul.f32 0.5, %v1844
          %v1846 = vsub.f32 1.5, %v1845
          %v1847 = vmul.f32 %v1842, %v1846
          %vm1848 = vweird.f32 %v1798
          %vm1849 = vweird.f32 %v1842
          %vm1850 = vmor %vm1848, %vm1849
          %v1851 = vsel %vm1850, %v1842, %v1847
          %v1852 = vrsqrt.pop %v1799
          %v1853 = vmul.f32 %v1852, %v1799
          %v1854 = vmul.f32 %v1853, %v1852
          %v1855 = vmul.f32 0.5, %v1854
          %v1856 = vsub.f32 1.5, %v1855
          %v1857 = vmul.f32 %v1852, %v1856
          %vm1858 = vweird.f32 %v1799
          %vm1859 = vweird.f32 %v1852
          %vm1860 = vmor %vm1858, %vm1859
          %v1861 = vsel %vm1860, %v1852, %v1857
          %v1862 = vrsqrt.pop %v1800
          %v1863 = vmul.f32 %v1862, %v1800
          %v1864 = vmul.f32 %v1863, %v1862
          %v1865 = vmul.f32 0.5, %v1864
          %v1866 = vsub.f32 1.5, %v1865
          %v1867 = vmul.f32 %v1862, %v1866
          %vm1868 = vweird.f32 %v1800
          %vm1869 = vweird.f32 %v1862
          %vm1870 = vmor %vm1868, %vm1869
          %v1871 = vsel %vm1870, %v1862, %v1867
          %v1872 = vrsqrt.pop %v1801
          %v1873 = vmul.f32 %v1872, %v1801
          %v1874 = vmul.f32 %v1873, %v1872
          %v1875 = vmul.f32 0.5, %v1874
          %v1876 = vsub.f32 1.5, %v1875
          %v1877 = vmul.f32 %v1872, %v1876
          %vm1878 = vweird.f32 %v1801
          %vm1879 = vweird.f32 %v1872
          %vm1880 = vmor %vm1878, %vm1879
          %v1881 = vsel %vm1880, %v1872, %v1877
          %v1882 = vmul.f32 %v1714, %v1811
          %v1883 = vmul.f32 %v1715, %v1821
          %v1884 = vmul.f32 %v1716, %v1831
          %v1885 = vmul.f32 %v1717, %v1841
          %v1886 = vmul.f32 %v1718, %v1851
          %v1887 = vmul.f32 %v1719, %v1861
          %v1888 = vmul.f32 %v1720, %v1871
          %v1889 = vmul.f32 %v1721, %v1881
          %1890 = vrot.lane.b32.xlu0 %v569, 80
          %v1891 = vpop.permute.xlu0 %1890
          %v1893 = vmul.f32 %v1882, %v1891
          %v1894 = vmul.f32 %v1883, %v1891
          %v1895 = vmul.f32 %v1884, %v1891
          %v1896 = vmul.f32 %v1885, %v1891
          %v1897 = vmul.f32 %v1886, %v1891
          %v1898 = vmul.f32 %v1887, %v1891
          %v1899 = vmul.f32 %v1888, %v1891
          %v1900 = vmul.f32 %v1889, %v1891
          %1901 = vrot.lane.b32.xlu0 %v580, 80
          %v1902 = vpop.permute.xlu0 %1901
          %v1904 = vadd.f32 %v1893, %v1902
          %v1905 = vadd.f32 %v1894, %v1902
          %v1906 = vadd.f32 %v1895, %v1902
          %v1907 = vadd.f32 %v1896, %v1902
          %v1908 = vadd.f32 %v1897, %v1902
          %v1909 = vadd.f32 %v1898, %v1902
          %v1910 = vadd.f32 %v1899, %v1902
          %v1911 = vadd.f32 %v1900, %v1902
          %vm1912 = vcmask 786048
          %1913 = vst.msk [vmem:[%s244] sm:$0xff] %vm1912, %v1904
          %1914 = vst.msk [vmem:[%s244 + $0x8] sm:$0xff] %vm1912, %v1905
          %1915 = vst.msk [vmem:[%s244 + $0x10] sm:$0xff] %vm1912, %v1906
          %1916 = vst.msk [vmem:[%s244 + $0x18] sm:$0xff] %vm1912, %v1907
          %1917 = vst.msk [vmem:[%s244 + $0x20] sm:$0xff] %vm1912, %v1908
          %1918 = vst.msk [vmem:[%s244 + $0x28] sm:$0xff] %vm1912, %v1909
          %1919 = vst.msk [vmem:[%s244 + $0x30] sm:$0xff] %vm1912, %v1910
          %1920 = vst.msk [vmem:[%s244 + $0x38] sm:$0xff] %vm1912, %v1911
          %1921 = vrot.lane.b32.xlu0 %v374, 32
          %v1922 = vpop.permute.xlu0 %1921
          %1923 = vrot.lane.b32.xlu0 %v375, 32
          %v1924 = vpop.permute.xlu0 %1923
          %1925 = vrot.lane.b32.xlu0 %v376, 32
          %v1926 = vpop.permute.xlu0 %1925
          %1927 = vrot.lane.b32.xlu0 %v377, 32
          %v1928 = vpop.permute.xlu0 %1927
          %1929 = vrot.lane.b32.xlu0 %v378, 32
          %v1930 = vpop.permute.xlu0 %1929
          %1931 = vrot.lane.b32.xlu0 %v379, 32
          %v1932 = vpop.permute.xlu0 %1931
          %1933 = vrot.lane.b32.xlu0 %v380, 32
          %v1934 = vpop.permute.xlu0 %1933
          %1935 = vrot.lane.b32.xlu0 %v381, 32
          %v1936 = vpop.permute.xlu0 %1935
          %v1945 = vsel %vm384, %v1922, 0.0
          %1946 = vadd.xlane.f32.xlu0 %v1945
          %v1947 = vpop.xlane.xlu0 %1946
          %v1948 = vsel %vm384, %v1924, 0.0
          %1949 = vadd.xlane.f32.xlu0 %v1948
          %v1950 = vpop.xlane.xlu0 %1949
          %v1951 = vsel %vm384, %v1926, 0.0
          %1952 = vadd.xlane.f32.xlu0 %v1951
          %v1953 = vpop.xlane.xlu0 %1952
          %v1954 = vsel %vm384, %v1928, 0.0
          %1955 = vadd.xlane.f32.xlu0 %v1954
          %v1956 = vpop.xlane.xlu0 %1955
          %v1957 = vsel %vm384, %v1930, 0.0
          %1958 = vadd.xlane.f32.xlu0 %v1957
          %v1959 = vpop.xlane.xlu0 %1958
          %v1960 = vsel %vm384, %v1932, 0.0
          %1961 = vadd.xlane.f32.xlu0 %v1960
          %v1962 = vpop.xlane.xlu0 %1961
          %v1963 = vsel %vm384, %v1934, 0.0
          %1964 = vadd.xlane.f32.xlu0 %v1963
          %v1965 = vpop.xlane.xlu0 %1964
          %v1966 = vsel %vm384, %v1936, 0.0
          %1967 = vadd.xlane.f32.xlu0 %v1966
          %v1968 = vpop.xlane.xlu0 %1967
          %v1969 = vmul.f32 %v1947, %v415
          %v1970 = vmul.f32 %v1950, %v415
          %v1971 = vmul.f32 %v1953, %v415
          %v1972 = vmul.f32 %v1956, %v415
          %v1973 = vmul.f32 %v1959, %v415
          %v1974 = vmul.f32 %v1962, %v415
          %v1975 = vmul.f32 %v1965, %v415
          %v1976 = vmul.f32 %v1968, %v415
          %v1977 = vsub.f32 %v374, %v1969
          %v1978 = vsub.f32 %v375, %v1970
          %v1979 = vsub.f32 %v376, %v1971
          %v1980 = vsub.f32 %v377, %v1972
          %v1981 = vsub.f32 %v378, %v1973
          %v1982 = vsub.f32 %v379, %v1974
          %v1983 = vsub.f32 %v380, %v1975
          %v1984 = vsub.f32 %v381, %v1976
          %v1985 = vmul.f32 %v1977, %v1977
          %v1986 = vmul.f32 %v1978, %v1978
          %v1987 = vmul.f32 %v1979, %v1979
          %v1988 = vmul.f32 %v1980, %v1980
          %v1989 = vmul.f32 %v1981, %v1981
          %v1990 = vmul.f32 %v1982, %v1982
          %v1991 = vmul.f32 %v1983, %v1983
          %v1992 = vmul.f32 %v1984, %v1984
          %2001 = vrot.lane.b32.xlu0 %v1985, 32
          %v2002 = vpop.permute.xlu0 %2001
          %2003 = vrot.lane.b32.xlu0 %v1986, 32
          %v2004 = vpop.permute.xlu0 %2003
          %2005 = vrot.lane.b32.xlu0 %v1987, 32
          %v2006 = vpop.permute.xlu0 %2005
          %2007 = vrot.lane.b32.xlu0 %v1988, 32
          %v2008 = vpop.permute.xlu0 %2007
          %2009 = vrot.lane.b32.xlu0 %v1989, 32
          %v2010 = vpop.permute.xlu0 %2009
          %2011 = vrot.lane.b32.xlu0 %v1990, 32
          %v2012 = vpop.permute.xlu0 %2011
          %2013 = vrot.lane.b32.xlu0 %v1991, 32
          %v2014 = vpop.permute.xlu0 %2013
          %2015 = vrot.lane.b32.xlu0 %v1992, 32
          %v2016 = vpop.permute.xlu0 %2015
          %v2025 = vsel %vm384, %v2002, 0.0
          %2026 = vadd.xlane.f32.xlu0 %v2025
          %v2027 = vpop.xlane.xlu0 %2026
          %v2028 = vsel %vm384, %v2004, 0.0
          %2029 = vadd.xlane.f32.xlu0 %v2028
          %v2030 = vpop.xlane.xlu0 %2029
          %v2031 = vsel %vm384, %v2006, 0.0
          %2032 = vadd.xlane.f32.xlu0 %v2031
          %v2033 = vpop.xlane.xlu0 %2032
          %v2034 = vsel %vm384, %v2008, 0.0
          %2035 = vadd.xlane.f32.xlu0 %v2034
          %v2036 = vpop.xlane.xlu0 %2035
          %v2037 = vsel %vm384, %v2010, 0.0
          %2038 = vadd.xlane.f32.xlu0 %v2037
          %v2039 = vpop.xlane.xlu0 %2038
          %v2040 = vsel %vm384, %v2012, 0.0
          %2041 = vadd.xlane.f32.xlu0 %v2040
          %v2042 = vpop.xlane.xlu0 %2041
          %v2043 = vsel %vm384, %v2014, 0.0
          %2044 = vadd.xlane.f32.xlu0 %v2043
          %v2045 = vpop.xlane.xlu0 %2044
          %v2046 = vsel %vm384, %v2016, 0.0
          %2047 = vadd.xlane.f32.xlu0 %v2046
          %v2048 = vpop.xlane.xlu0 %2047
          %v2049 = vmul.f32 %v2027, %v415
          %v2050 = vmul.f32 %v2030, %v415
          %v2051 = vmul.f32 %v2033, %v415
          %v2052 = vmul.f32 %v2036, %v415
          %v2053 = vmul.f32 %v2039, %v415
          %v2054 = vmul.f32 %v2042, %v415
          %v2055 = vmul.f32 %v2045, %v415
          %v2056 = vmul.f32 %v2048, %v415
          %v2057 = vadd.f32 %v2049, 1e-05
          %v2058 = vadd.f32 %v2050, 1e-05
          %v2059 = vadd.f32 %v2051, 1e-05
          %v2060 = vadd.f32 %v2052, 1e-05
          %v2061 = vadd.f32 %v2053, 1e-05
          %v2062 = vadd.f32 %v2054, 1e-05
          %v2063 = vadd.f32 %v2055, 1e-05
          %v2064 = vadd.f32 %v2056, 1e-05
          %v2065 = vrsqrt.pop %v2057
          %v2066 = vmul.f32 %v2065, %v2057
          %v2067 = vmul.f32 %v2066, %v2065
          %v2068 = vmul.f32 0.5, %v2067
          %v2069 = vsub.f32 1.5, %v2068
          %v2070 = vmul.f32 %v2065, %v2069
          %vm2071 = vweird.f32 %v2057
          %vm2072 = vweird.f32 %v2065
          %vm2073 = vmor %vm2071, %vm2072
          %v2074 = vsel %vm2073, %v2065, %v2070
          %v2075 = vrsqrt.pop %v2058
          %v2076 = vmul.f32 %v2075, %v2058
          %v2077 = vmul.f32 %v2076, %v2075
          %v2078 = vmul.f32 0.5, %v2077
          %v2079 = vsub.f32 1.5, %v2078
          %v2080 = vmul.f32 %v2075, %v2079
          %vm2081 = vweird.f32 %v2058
          %vm2082 = vweird.f32 %v2075
          %vm2083 = vmor %vm2081, %vm2082
          %v2084 = vsel %vm2083, %v2075, %v2080
          %v2085 = vrsqrt.pop %v2059
          %v2086 = vmul.f32 %v2085, %v2059
          %v2087 = vmul.f32 %v2086, %v2085
          %v2088 = vmul.f32 0.5, %v2087
          %v2089 = vsub.f32 1.5, %v2088
          %v2090 = vmul.f32 %v2085, %v2089
          %vm2091 = vweird.f32 %v2059
          %vm2092 = vweird.f32 %v2085
          %vm2093 = vmor %vm2091, %vm2092
          %v2094 = vsel %vm2093, %v2085, %v2090
          %v2095 = vrsqrt.pop %v2060
          %v2096 = vmul.f32 %v2095, %v2060
          %v2097 = vmul.f32 %v2096, %v2095
          %v2098 = vmul.f32 0.5, %v2097
          %v2099 = vsub.f32 1.5, %v2098
          %v2100 = vmul.f32 %v2095, %v2099
          %vm2101 = vweird.f32 %v2060
          %vm2102 = vweird.f32 %v2095
          %vm2103 = vmor %vm2101, %vm2102
          %v2104 = vsel %vm2103, %v2095, %v2100
          %v2105 = vrsqrt.pop %v2061
          %v2106 = vmul.f32 %v2105, %v2061
          %v2107 = vmul.f32 %v2106, %v2105
          %v2108 = vmul.f32 0.5, %v2107
          %v2109 = vsub.f32 1.5, %v2108
          %v2110 = vmul.f32 %v2105, %v2109
          %vm2111 = vweird.f32 %v2061
          %vm2112 = vweird.f32 %v2105
          %vm2113 = vmor %vm2111, %vm2112
          %v2114 = vsel %vm2113, %v2105, %v2110
          %v2115 = vrsqrt.pop %v2062
          %v2116 = vmul.f32 %v2115, %v2062
          %v2117 = vmul.f32 %v2116, %v2115
          %v2118 = vmul.f32 0.5, %v2117
          %v2119 = vsub.f32 1.5, %v2118
          %v2120 = vmul.f32 %v2115, %v2119
          %vm2121 = vweird.f32 %v2062
          %vm2122 = vweird.f32 %v2115
          %vm2123 = vmor %vm2121, %vm2122
          %v2124 = vsel %vm2123, %v2115, %v2120
          %v2125 = vrsqrt.pop %v2063
          %v2126 = vmul.f32 %v2125, %v2063
          %v2127 = vmul.f32 %v2126, %v2125
          %v2128 = vmul.f32 0.5, %v2127
          %v2129 = vsub.f32 1.5, %v2128
          %v2130 = vmul.f32 %v2125, %v2129
          %vm2131 = vweird.f32 %v2063
          %vm2132 = vweird.f32 %v2125
          %vm2133 = vmor %vm2131, %vm2132
          %v2134 = vsel %vm2133, %v2125, %v2130
          %v2135 = vrsqrt.pop %v2064
          %v2136 = vmul.f32 %v2135, %v2064
          %v2137 = vmul.f32 %v2136, %v2135
          %v2138 = vmul.f32 0.5, %v2137
          %v2139 = vsub.f32 1.5, %v2138
          %v2140 = vmul.f32 %v2135, %v2139
          %vm2141 = vweird.f32 %v2064
          %vm2142 = vweird.f32 %v2135
          %vm2143 = vmor %vm2141, %vm2142
          %v2144 = vsel %vm2143, %v2135, %v2140
          %v2145 = vmul.f32 %v1977, %v2074
          %v2146 = vmul.f32 %v1978, %v2084
          %v2147 = vmul.f32 %v1979, %v2094
          %v2148 = vmul.f32 %v1980, %v2104
          %v2149 = vmul.f32 %v1981, %v2114
          %v2150 = vmul.f32 %v1982, %v2124
          %v2151 = vmul.f32 %v1983, %v2134
          %v2152 = vmul.f32 %v1984, %v2144
          %2153 = vrot.lane.b32.xlu0 %v569, 96
          %v2154 = vpop.permute.xlu0 %2153
          %v2156 = vmul.f32 %v2145, %v2154
          %v2157 = vmul.f32 %v2146, %v2154
          %v2158 = vmul.f32 %v2147, %v2154
          %v2159 = vmul.f32 %v2148, %v2154
          %v2160 = vmul.f32 %v2149, %v2154
          %v2161 = vmul.f32 %v2150, %v2154
          %v2162 = vmul.f32 %v2151, %v2154
          %v2163 = vmul.f32 %v2152, %v2154
          %2164 = vrot.lane.b32.xlu0 %v580, 96
          %v2165 = vpop.permute.xlu0 %2164
          %v2167 = vadd.f32 %v2156, %v2165
          %v2168 = vadd.f32 %v2157, %v2165
          %v2169 = vadd.f32 %v2158, %v2165
          %v2170 = vadd.f32 %v2159, %v2165
          %v2171 = vadd.f32 %v2160, %v2165
          %v2172 = vadd.f32 %v2161, %v2165
          %v2173 = vadd.f32 %v2162, %v2165
          %v2174 = vadd.f32 %v2163, %v2165
          %vm2175 = vcmask 917248
          %2176 = vst.msk [vmem:[%s244] sm:$0xff] %vm2175, %v2167
          %2177 = vst.msk [vmem:[%s244 + $0x8] sm:$0xff] %vm2175, %v2168
          %2178 = vst.msk [vmem:[%s244 + $0x10] sm:$0xff] %vm2175, %v2169
          %2179 = vst.msk [vmem:[%s244 + $0x18] sm:$0xff] %vm2175, %v2170
          %2180 = vst.msk [vmem:[%s244 + $0x20] sm:$0xff] %vm2175, %v2171
          %2181 = vst.msk [vmem:[%s244 + $0x28] sm:$0xff] %vm2175, %v2172
          %2182 = vst.msk [vmem:[%s244 + $0x30] sm:$0xff] %vm2175, %v2173
          %2183 = vst.msk [vmem:[%s244 + $0x38] sm:$0xff] %vm2175, %v2174
          %2184 = vrot.lane.b32.xlu0 %v374, 16
          %v2185 = vpop.permute.xlu0 %2184
          %2186 = vrot.lane.b32.xlu0 %v375, 16
          %v2187 = vpop.permute.xlu0 %2186
          %2188 = vrot.lane.b32.xlu0 %v376, 16
          %v2189 = vpop.permute.xlu0 %2188
          %2190 = vrot.lane.b32.xlu0 %v377, 16
          %v2191 = vpop.permute.xlu0 %2190
          %2192 = vrot.lane.b32.xlu0 %v378, 16
          %v2193 = vpop.permute.xlu0 %2192
          %2194 = vrot.lane.b32.xlu0 %v379, 16
          %v2195 = vpop.permute.xlu0 %2194
          %2196 = vrot.lane.b32.xlu0 %v380, 16
          %v2197 = vpop.permute.xlu0 %2196
          %2198 = vrot.lane.b32.xlu0 %v381, 16
          %v2199 = vpop.permute.xlu0 %2198
          %v2208 = vsel %vm384, %v2185, 0.0
          %2209 = vadd.xlane.f32.xlu0 %v2208
          %v2210 = vpop.xlane.xlu0 %2209
          %v2211 = vsel %vm384, %v2187, 0.0
          %2212 = vadd.xlane.f32.xlu0 %v2211
          %v2213 = vpop.xlane.xlu0 %2212
          %v2214 = vsel %vm384, %v2189, 0.0
          %2215 = vadd.xlane.f32.xlu0 %v2214
          %v2216 = vpop.xlane.xlu0 %2215
          %v2217 = vsel %vm384, %v2191, 0.0
          %2218 = vadd.xlane.f32.xlu0 %v2217
          %v2219 = vpop.xlane.xlu0 %2218
          %v2220 = vsel %vm384, %v2193, 0.0
          %2221 = vadd.xlane.f32.xlu0 %v2220
          %v2222 = vpop.xlane.xlu0 %2221
          %v2223 = vsel %vm384, %v2195, 0.0
          %2224 = vadd.xlane.f32.xlu0 %v2223
          %v2225 = vpop.xlane.xlu0 %2224
          %v2226 = vsel %vm384, %v2197, 0.0
          %2227 = vadd.xlane.f32.xlu0 %v2226
          %v2228 = vpop.xlane.xlu0 %2227
          %v2229 = vsel %vm384, %v2199, 0.0
          %2230 = vadd.xlane.f32.xlu0 %v2229
          %v2231 = vpop.xlane.xlu0 %2230
          %v2232 = vmul.f32 %v2210, %v415
          %v2233 = vmul.f32 %v2213, %v415
          %v2234 = vmul.f32 %v2216, %v415
          %v2235 = vmul.f32 %v2219, %v415
          %v2236 = vmul.f32 %v2222, %v415
          %v2237 = vmul.f32 %v2225, %v415
          %v2238 = vmul.f32 %v2228, %v415
          %v2239 = vmul.f32 %v2231, %v415
          %v2240 = vsub.f32 %v374, %v2232
          %v2241 = vsub.f32 %v375, %v2233
          %v2242 = vsub.f32 %v376, %v2234
          %v2243 = vsub.f32 %v377, %v2235
          %v2244 = vsub.f32 %v378, %v2236
          %v2245 = vsub.f32 %v379, %v2237
          %v2246 = vsub.f32 %v380, %v2238
          %v2247 = vsub.f32 %v381, %v2239
          %v2248 = vmul.f32 %v2240, %v2240
          %v2249 = vmul.f32 %v2241, %v2241
          %v2250 = vmul.f32 %v2242, %v2242
          %v2251 = vmul.f32 %v2243, %v2243
          %v2252 = vmul.f32 %v2244, %v2244
          %v2253 = vmul.f32 %v2245, %v2245
          %v2254 = vmul.f32 %v2246, %v2246
          %v2255 = vmul.f32 %v2247, %v2247
          %2264 = vrot.lane.b32.xlu0 %v2248, 16
          %v2265 = vpop.permute.xlu0 %2264
          %2266 = vrot.lane.b32.xlu0 %v2249, 16
          %v2267 = vpop.permute.xlu0 %2266
          %2268 = vrot.lane.b32.xlu0 %v2250, 16
          %v2269 = vpop.permute.xlu0 %2268
          %2270 = vrot.lane.b32.xlu0 %v2251, 16
          %v2271 = vpop.permute.xlu0 %2270
          %2272 = vrot.lane.b32.xlu0 %v2252, 16
          %v2273 = vpop.permute.xlu0 %2272
          %2274 = vrot.lane.b32.xlu0 %v2253, 16
          %v2275 = vpop.permute.xlu0 %2274
          %2276 = vrot.lane.b32.xlu0 %v2254, 16
          %v2277 = vpop.permute.xlu0 %2276
          %2278 = vrot.lane.b32.xlu0 %v2255, 16
          %v2279 = vpop.permute.xlu0 %2278
          %v2288 = vsel %vm384, %v2265, 0.0
          %2289 = vadd.xlane.f32.xlu0 %v2288
          %v2290 = vpop.xlane.xlu0 %2289
          %v2291 = vsel %vm384, %v2267, 0.0
          %2292 = vadd.xlane.f32.xlu0 %v2291
          %v2293 = vpop.xlane.xlu0 %2292
          %v2294 = vsel %vm384, %v2269, 0.0
          %2295 = vadd.xlane.f32.xlu0 %v2294
          %v2296 = vpop.xlane.xlu0 %2295
          %v2297 = vsel %vm384, %v2271, 0.0
          %2298 = vadd.xlane.f32.xlu0 %v2297
          %v2299 = vpop.xlane.xlu0 %2298
          %v2300 = vsel %vm384, %v2273, 0.0
          %2301 = vadd.xlane.f32.xlu0 %v2300
          %v2302 = vpop.xlane.xlu0 %2301
          %v2303 = vsel %vm384, %v2275, 0.0
          %2304 = vadd.xlane.f32.xlu0 %v2303
          %v2305 = vpop.xlane.xlu0 %2304
          %v2306 = vsel %vm384, %v2277, 0.0
          %2307 = vadd.xlane.f32.xlu0 %v2306
          %v2308 = vpop.xlane.xlu0 %2307
          %v2309 = vsel %vm384, %v2279, 0.0
          %2310 = vadd.xlane.f32.xlu0 %v2309
          %v2311 = vpop.xlane.xlu0 %2310
          %v2312 = vmul.f32 %v2290, %v415
          %v2313 = vmul.f32 %v2293, %v415
          %v2314 = vmul.f32 %v2296, %v415
          %v2315 = vmul.f32 %v2299, %v415
          %v2316 = vmul.f32 %v2302, %v415
          %v2317 = vmul.f32 %v2305, %v415
          %v2318 = vmul.f32 %v2308, %v415
          %v2319 = vmul.f32 %v2311, %v415
          %v2320 = vadd.f32 %v2312, 1e-05
          %v2321 = vadd.f32 %v2313, 1e-05
          %v2322 = vadd.f32 %v2314, 1e-05
          %v2323 = vadd.f32 %v2315, 1e-05
          %v2324 = vadd.f32 %v2316, 1e-05
          %v2325 = vadd.f32 %v2317, 1e-05
          %v2326 = vadd.f32 %v2318, 1e-05
          %v2327 = vadd.f32 %v2319, 1e-05
          %v2328 = vrsqrt.pop %v2320
          %v2329 = vmul.f32 %v2328, %v2320
          %v2330 = vmul.f32 %v2329, %v2328
          %v2331 = vmul.f32 0.5, %v2330
          %v2332 = vsub.f32 1.5, %v2331
          %v2333 = vmul.f32 %v2328, %v2332
          %vm2334 = vweird.f32 %v2320
          %vm2335 = vweird.f32 %v2328
          %vm2336 = vmor %vm2334, %vm2335
          %v2337 = vsel %vm2336, %v2328, %v2333
          %v2338 = vrsqrt.pop %v2321
          %v2339 = vmul.f32 %v2338, %v2321
          %v2340 = vmul.f32 %v2339, %v2338
          %v2341 = vmul.f32 0.5, %v2340
          %v2342 = vsub.f32 1.5, %v2341
          %v2343 = vmul.f32 %v2338, %v2342
          %vm2344 = vweird.f32 %v2321
          %vm2345 = vweird.f32 %v2338
          %vm2346 = vmor %vm2344, %vm2345
          %v2347 = vsel %vm2346, %v2338, %v2343
          %v2348 = vrsqrt.pop %v2322
          %v2349 = vmul.f32 %v2348, %v2322
          %v2350 = vmul.f32 %v2349, %v2348
          %v2351 = vmul.f32 0.5, %v2350
          %v2352 = vsub.f32 1.5, %v2351
          %v2353 = vmul.f32 %v2348, %v2352
          %vm2354 = vweird.f32 %v2322
          %vm2355 = vweird.f32 %v2348
          %vm2356 = vmor %vm2354, %vm2355
          %v2357 = vsel %vm2356, %v2348, %v2353
          %v2358 = vrsqrt.pop %v2323
          %v2359 = vmul.f32 %v2358, %v2323
          %v2360 = vmul.f32 %v2359, %v2358
          %v2361 = vmul.f32 0.5, %v2360
          %v2362 = vsub.f32 1.5, %v2361
          %v2363 = vmul.f32 %v2358, %v2362
          %vm2364 = vweird.f32 %v2323
          %vm2365 = vweird.f32 %v2358
          %vm2366 = vmor %vm2364, %vm2365
          %v2367 = vsel %vm2366, %v2358, %v2363
          %v2368 = vrsqrt.pop %v2324
          %v2369 = vmul.f32 %v2368, %v2324
          %v2370 = vmul.f32 %v2369, %v2368
          %v2371 = vmul.f32 0.5, %v2370
          %v2372 = vsub.f32 1.5, %v2371
          %v2373 = vmul.f32 %v2368, %v2372
          %vm2374 = vweird.f32 %v2324
          %vm2375 = vweird.f32 %v2368
          %vm2376 = vmor %vm2374, %vm2375
          %v2377 = vsel %vm2376, %v2368, %v2373
          %v2378 = vrsqrt.pop %v2325
          %v2379 = vmul.f32 %v2378, %v2325
          %v2380 = vmul.f32 %v2379, %v2378
          %v2381 = vmul.f32 0.5, %v2380
          %v2382 = vsub.f32 1.5, %v2381
          %v2383 = vmul.f32 %v2378, %v2382
          %vm2384 = vweird.f32 %v2325
          %vm2385 = vweird.f32 %v2378
          %vm2386 = vmor %vm2384, %vm2385
          %v2387 = vsel %vm2386, %v2378, %v2383
          %v2388 = vrsqrt.pop %v2326
          %v2389 = vmul.f32 %v2388, %v2326
          %v2390 = vmul.f32 %v2389, %v2388
          %v2391 = vmul.f32 0.5, %v2390
          %v2392 = vsub.f32 1.5, %v2391
          %v2393 = vmul.f32 %v2388, %v2392
          %vm2394 = vweird.f32 %v2326
          %vm2395 = vweird.f32 %v2388
          %vm2396 = vmor %vm2394, %vm2395
          %v2397 = vsel %vm2396, %v2388, %v2393
          %v2398 = vrsqrt.pop %v2327
          %v2399 = vmul.f32 %v2398, %v2327
          %v2400 = vmul.f32 %v2399, %v2398
          %v2401 = vmul.f32 0.5, %v2400
          %v2402 = vsub.f32 1.5, %v2401
          %v2403 = vmul.f32 %v2398, %v2402
          %vm2404 = vweird.f32 %v2327
          %vm2405 = vweird.f32 %v2398
          %vm2406 = vmor %vm2404, %vm2405
          %v2407 = vsel %vm2406, %v2398, %v2403
          %v2408 = vmul.f32 %v2240, %v2337
          %v2409 = vmul.f32 %v2241, %v2347
          %v2410 = vmul.f32 %v2242, %v2357
          %v2411 = vmul.f32 %v2243, %v2367
          %v2412 = vmul.f32 %v2244, %v2377
          %v2413 = vmul.f32 %v2245, %v2387
          %v2414 = vmul.f32 %v2246, %v2397
          %v2415 = vmul.f32 %v2247, %v2407
          %2416 = vrot.lane.b32.xlu0 %v569, 112
          %v2417 = vpop.permute.xlu0 %2416
          %v2419 = vmul.f32 %v2408, %v2417
          %v2420 = vmul.f32 %v2409, %v2417
          %v2421 = vmul.f32 %v2410, %v2417
          %v2422 = vmul.f32 %v2411, %v2417
          %v2423 = vmul.f32 %v2412, %v2417
          %v2424 = vmul.f32 %v2413, %v2417
          %v2425 = vmul.f32 %v2414, %v2417
          %v2426 = vmul.f32 %v2415, %v2417
          %2427 = vrot.lane.b32.xlu0 %v580, 112
          %v2428 = vpop.permute.xlu0 %2427
          %v2430 = vadd.f32 %v2419, %v2428
          %v2431 = vadd.f32 %v2420, %v2428
          %v2432 = vadd.f32 %v2421, %v2428
          %v2433 = vadd.f32 %v2422, %v2428
          %v2434 = vadd.f32 %v2423, %v2428
          %v2435 = vadd.f32 %v2424, %v2428
          %v2436 = vadd.f32 %v2425, %v2428
          %v2437 = vadd.f32 %v2426, %v2428
          %vm2438 = vcmask 1048448
          %2439 = vst.msk [vmem:[%s244] sm:$0xff] %vm2438, %v2430
          %2440 = vst.msk [vmem:[%s244 + $0x8] sm:$0xff] %vm2438, %v2431
          %2441 = vst.msk [vmem:[%s244 + $0x10] sm:$0xff] %vm2438, %v2432
          %2442 = vst.msk [vmem:[%s244 + $0x18] sm:$0xff] %vm2438, %v2433
          %2443 = vst.msk [vmem:[%s244 + $0x20] sm:$0xff] %vm2438, %v2434
          %2444 = vst.msk [vmem:[%s244 + $0x28] sm:$0xff] %vm2438, %v2435
          %2445 = vst.msk [vmem:[%s244 + $0x30] sm:$0xff] %vm2438, %v2436
          %2446 = vst.msk [vmem:[%s244 + $0x38] sm:$0xff] %vm2438, %v2437
        $region44: #{tpu_custom_call.1} parent=35 // pred_fallthru
          _
        %s2447 = sand.u32 %s145, 1
        %s2448 = scalar_lea.sflag [#allocation3], %s2447
        %s2449 = sand.u32 %s145, 1
        %s2450 = smul.addr %s2449, 64
        %s2451 = scalar_lea.vmem [#allocation2], %s2450
        // Predicated region
        $region45: #{tpu_custom_call.1} parent=35 // pred_check
          %p2452 = pneg %p155
        $region46: #{tpu_custom_call.1} parent=35 // pred_check_branch
          %2454 = sbr.rel (%p2452) target = $region48
        $region47: #{tpu_custom_call.1} parent=35 // pred_region
          %s2455 = smul.u32 8, %s24
          %2457 = vsyncadd %s2448, 0
          %s2458 = sadd.s32 %s23, %s2455
          %s2459 = smul.addr %s2458, 8
          %s2460 = scalar_lea.hbm %s4, %s2459
          %s2461 = sshll.u32 %s2451, 4
          %s2462 = int_to_ptr.vmem [resolvable:$true] %s2461
          %s2463 = sshll.u32 %s2460, 4
          %s2464 = int_to_ptr.hbm [resolvable:$true] %s2463
          %2469 = dma.vmem_to_hbm [thread:$0]  %s2462, 1024, %s2464, %s2448, 128, 128, 8
        $region48: #{tpu_custom_call.1} parent=35 // pred_fallthru
          _
      $region36: #{tpu_custom_call.1} parent=5 // pred_fallthru
        _
      %p2470 = scmp.le.s32.totalorder 2, %s13
      // Predicated region
      $region49: #{tpu_custom_call.1} parent=5 // pred_check
        %p2471 = pneg %p2470
      $region50: #{tpu_custom_call.1} parent=5 // pred_check_branch
        %2473 = sbr.rel (%p2471) target = $region52
      $region51: #{tpu_custom_call.1} parent=5 // pred_region
        %s2474 = ssub.s32 %s13, 2
        // Predicated region
        $region53: #{tpu_custom_call.1} parent=51 // pred_check
          %p2475 = pneg %p161
        $region54: #{tpu_custom_call.1} parent=51 // pred_check_branch
          %2477 = sbr.rel (%p2475) target = $region56
        $region55: #{tpu_custom_call.1} parent=51 // pred_region
          %s2478 = sand.u32 %s146, 1
          %s2479 = scalar_lea.sflag [#allocation3], %s2478
          %s2480 = sand.u32 %s146, 1
          %s2481 = smul.addr %s2480, 64
          %s2482 = scalar_lea.vmem [#allocation2], %s2481
          %2484 = dma.done %s2479, 1024
        $region56: #{tpu_custom_call.1} parent=51 // pred_fallthru
          _
      $region52: #{tpu_custom_call.1} parent=5 // pred_fallthru
        _
    $region6: #{tpu_custom_call.1} parent=1 // loop_footer
      %s17 = sadd.s32 1, %s13
    $region7: #{tpu_custom_call.1} parent=1 // loop_footer_branch
      %12 = sbr.rel target = $region3
    $region8: #{tpu_custom_call.1} parent=1 // loop_exit
      _
    %2485 = vsyncpa [#allocation3], 1
    %s2486 = scalar_lea.sflag [#allocation3], 1
    %2487 = vsyncpa %s2486, 1

</llo_original>
